<compile_context>
chip_gen: v6e
topology: v6e:2x2x1
jax: 0.10.0
libtpu: 0.0.40
codegen_flags: <defaults>
</compile_context>

<pallas_src>
import functools

import jax
import jax.numpy as jnp
from jax.experimental import pallas as pl
from jax.experimental.pallas import tpu as pltpu

EPS = 1e-5


def _resblock_kernel(x_ref, w1_ref, w2_ref, out_ref, *, H, W):
    """One batch sample: out = x + IN(conv(pad(relu(IN(conv(pad(x))))))).

    x_ref/out_ref: (1, C, H*W) lane-dense tiles.
    w*_ref: (9, C, C) per-tap weights, tap k = kh*3 + kw, already in compute dtype.
    """
    C = x_ref.shape[1]
    HW = H * W
    x = x_ref[0].astype(jnp.float32)                       # (C, HW)

    # Reflection-border masks at (1, HW); broadcast over channels in jnp.where.
    lane = jax.lax.broadcasted_iota(jnp.int32, (1, HW), 1)
    wpos = lane % W
    w_first = wpos == 0
    w_last = wpos == (W - 1)
    h_first = lane < W
    h_last = lane >= (H - 1) * W

    def im2col(a):
        """Nine (C, HW) arrays equal to reflect_pad(a)[:, h+kh-1, w+kw-1], k=kh*3+kw."""
        up = pltpu.roll(a, W, axis=1)              # value at (h-1, w), circular
        dn = pltpu.roll(a, HW - W, axis=1)         # value at (h+1, w), circular
        rows = [
            jnp.where(h_first, dn, up),            # kh=0: reflect row -1 -> row 1
            a,                                     # kh=1
            jnp.where(h_last, up, dn),             # kh=2: reflect row H -> row H-2
        ]
        patches = []
        for b in rows:
            left = pltpu.roll(b, 1, axis=1)        # value at (h, w-1), circular
            right = pltpu.roll(b, HW - 1, axis=1)  # value at (h, w+1), circular
            patches.append(jnp.where(w_first, right, left))   # kw=0
            patches.append(b)                                  # kw=1
            patches.append(jnp.where(w_last, left, right))     # kw=2
        return patches

    def conv_in(a, w_taps):
        """InstanceNorm(conv3x3(reflect_pad(a))): 9 accumulated MXU matmuls + stats."""
        patches = im2col(a)
        y = jnp.zeros((C, HW), jnp.float32)
        for k in range(9):
            wk = w_taps[k]                                         # (C, C)
            y = y + jnp.dot(wk, patches[k].astype(wk.dtype),
                            preferred_element_type=jnp.float32)    # f32 accumulate
        inv_n = 1.0 / HW
        mean = jnp.sum(y, axis=1, keepdims=True) * inv_n
        var = jnp.sum(y * y, axis=1, keepdims=True) * inv_n - mean * mean
        var = jnp.maximum(var, 0.0)          # guard one-pass cancellation
        return (y - mean) * jax.lax.rsqrt(var + EPS)

    w1 = w1_ref[...]
    w2 = w2_ref[...]
    h = jnp.maximum(conv_in(x, w1), 0.0)                 # stage 1 + ReLU
    out_ref[0] = (x + conv_in(h, w2)).astype(out_ref.dtype)


def _to_tap_weights(w, dtype):
    """(O, I, 3, 3) conv weight -> (9, O, I); tap k = kh*3 + kw holds w[:, :, kh, kw]."""
    o, i = w.shape[0], w.shape[1]
    return w.transpose(2, 3, 0, 1).reshape(9, o, i).astype(dtype)


def residual_block(x, w1, b1, w2, b2, *, compute_dtype=jnp.bfloat16):
    """Pallas TPU implementation of ResidualBlock.forward.  x: (N, C, H, W)."""
    # b1/b2 accepted for API parity but unused: a per-channel conv bias is
    # cancelled exactly by the affine=False InstanceNorm mean subtraction.
    # (If the module ever gains affine IN params, this elision must be removed.)
    del b1, b2
    N, C, H, W = x.shape
    HW = H * W

    x2 = x.reshape(N, C, HW)                 # lane-dense activations (free reshape)
    w1t = _to_tap_weights(w1, compute_dtype)
    w2t = _to_tap_weights(w2, compute_dtype)

    # Full (C, HW) / (C, C) extents in the last two dims => legal for any C, HW
    # (no HBM channel padding or output slicing needed).
    act_spec = pl.BlockSpec((1, C, HW), lambda n: (n, 0, 0))
    w_spec = pl.BlockSpec((9, C, C), lambda n: (0, 0, 0))

    out = pl.pallas_call(
        functools.partial(_resblock_kernel, H=H, W=W),
        out_shape=jax.ShapeDtypeStruct((N, C, HW), x.dtype),
        grid=(N,),
        in_specs=[act_spec, w_spec, w_spec],
        out_specs=act_spec,
        compiler_params=pltpu.CompilerParams(
            dimension_semantics=("parallel",)),
    )(x2, w1t, w2t)
    return out.reshape(N, C, H, W)


# ---------------- pure-JAX reference (matches the PyTorch module) ----------------
def _reflect_pad1(x):
    return jnp.pad(x, ((0, 0), (0, 0), (1, 1), (1, 1)), mode="reflect")


def _ref_forward(x, w1, b1, w2, b2):
    def conv(y, w, b):
        yp = _reflect_pad1(y)
        out = jax.lax.conv_general_dilated(
            yp, w, window_strides=(1, 1), padding="VALID",
            dimension_numbers=("NCHW", "OIHW", "NCHW"))
        return out + b[None, :, None, None]

    def inorm(y):
        m = y.mean(axis=(2, 3), keepdims=True)
        v = ((y - m) ** 2).mean(axis=(2, 3), keepdims=True)
        return (y - m) * jax.lax.rsqrt(v + EPS)

    h = jnp.maximum(inorm(conv(x, w1, b1)), 0.0)
    return x + inorm(conv(h, w2, b2))


if __name__ == "__main__":
    N, C, H, W = 2, 4, 16, 16
    key = jax.random.PRNGKey(0)
    kx, kw1, kb1, kw2, kb2 = jax.random.split(key, 5)

    x = jax.random.normal(kx, (N, C, H, W), dtype=jnp.float32)
    # Deterministic synthetic params (Conv2d(in_channels, in_channels, 3), bias=True)
    fan_in = C * 3 * 3
    bound = 1.0 / (fan_in ** 0.5)
    w1 = jax.random.uniform(kw1, (C, C, 3, 3), jnp.float32, -bound, bound)
    b1 = jax.random.uniform(kb1, (C,), jnp.float32, -bound, bound)
    w2 = jax.random.uniform(kw2, (C, C, 3, 3), jnp.float32, -bound, bound)
    b2 = jax.random.uniform(kb2, (C,), jnp.float32, -bound, bound)

    ref = jax.block_until_ready(_ref_forward(x, w1, b1, w2, b2))

    # Exactness check with f32 MXU operands (same kernel, tight tolerance).
    out_f32 = jax.block_until_ready(
        residual_block(x, w1, b1, w2, b2, compute_dtype=jnp.float32))
    assert out_f32.shape == (N, C, H, W)
    assert jnp.allclose(out_f32, ref, atol=1e-4, rtol=1e-4), "f32 path mismatch"

    # Fast (default) bf16-MXU path: looser tolerance for bf16 operand rounding.
    out = jax.block_until_ready(residual_block(x, w1, b1, w2, b2))
    assert out.shape == (N, C, H, W)
    assert jnp.allclose(out, ref, atol=0.15, rtol=0.1), "bf16 path mismatch"

    print("KERNEL_OK")
</pallas_src>

<mosaic_0001>
module attributes {stable_mosaic.version = 11 : i64} {
  func.func @_resblock_kernel(%arg0: i32, %arg1: memref<1x4x256xf32, #tpu.memory_space<vmem>>, %arg2: memref<9x4x4xf32, #tpu.memory_space<vmem>>, %arg3: memref<9x4x4xf32, #tpu.memory_space<vmem>>, %arg4: memref<1x4x256xf32, #tpu.memory_space<vmem>>) attributes {dimension_semantics = [#tpu.dimension_semantics<parallel>], iteration_bounds = array<i64: 2>, scalar_prefetch = 0 : i64, scratch_operands = 0 : i64, tpu.core_type = #tpu.core_type<tc>, window_params = [{transform_indices = @transform_0, window_bounds = array<i64: 1, 4, 256>}, {pipeline_mode = #tpu.pipeline_mode<synchronous>, transform_indices = @transform_1, window_bounds = array<i64: 9, 4, 4>}, {pipeline_mode = #tpu.pipeline_mode<synchronous>, transform_indices = @transform_2, window_bounds = array<i64: 9, 4, 4>}, {transform_indices = @transform_3, window_bounds = array<i64: 1, 4, 256>}]} {
    %c0 = arith.constant 0 : index
    %c0_0 = arith.constant 0 : index
    %c0_1 = arith.constant 0 : index
    %0 = vector.load %arg1[%c0, %c0_0, %c0_1] : memref<1x4x256xf32, #tpu.memory_space<vmem>>, vector<1x4x256xf32>
    %1 = vector.shape_cast %0 : vector<1x4x256xf32> to vector<4x256xf32>
    %2 = tpu.iota {dimensions = array<i32: 1>} : vector<1x256xi32>
    %c16_i32 = arith.constant 16 : i32
    %c0_i32 = arith.constant 0 : i32
    %3 = arith.cmpi eq, %c16_i32, %c0_i32 : i32
    %c1_i32 = arith.constant 1 : i32
    %4 = arith.select %3, %c1_i32, %c16_i32 : i32
    %5 = vector.broadcast %4 : i32 to vector<1x256xi32>
    %6 = arith.remsi %2, %5 : vector<1x256xi32>
    %c0_i32_2 = arith.constant 0 : i32
    %7 = vector.broadcast %c0_i32_2 : i32 to vector<1x256xi32>
    %8 = arith.cmpi ne, %6, %7 : vector<1x256xi32>
    %c0_i32_3 = arith.constant 0 : i32
    %9 = vector.broadcast %c0_i32_3 : i32 to vector<1x256xi32>
    %10 = arith.cmpi slt, %6, %9 : vector<1x256xi32>
    %c0_i32_4 = arith.constant 0 : i32
    %11 = arith.cmpi slt, %4, %c0_i32_4 : i32
    %12 = vector.broadcast %11 : i1 to vector<1x256xi1>
    %13 = vector.broadcast %12 : vector<1x256xi1> to vector<1x256xi1>
    %14 = arith.xori %10, %13 : vector<1x256xi1>
    %15 = arith.andi %14, %8 : vector<1x256xi1>
    %16 = vector.broadcast %4 : i32 to vector<1x256xi32>
    %17 = arith.addi %6, %16 : vector<1x256xi32>
    %18 = arith.select %15, %17, %6 : vector<1x256xi1>, vector<1x256xi32>
    %c0_i32_5 = arith.constant 0 : i32
    %19 = vector.broadcast %c0_i32_5 : i32 to vector<1x256xi32>
    %20 = arith.cmpi eq, %18, %19 : vector<1x256xi32>
    %c15_i32 = arith.constant 15 : i32
    %21 = vector.broadcast %c15_i32 : i32 to vector<1x256xi32>
    %22 = arith.cmpi eq, %18, %21 : vector<1x256xi32>
    %c16_i32_6 = arith.constant 16 : i32
    %23 = vector.broadcast %c16_i32_6 : i32 to vector<1x256xi32>
    %24 = arith.cmpi slt, %2, %23 : vector<1x256xi32>
    %c240_i32 = arith.constant 240 : i32
    %25 = vector.broadcast %c240_i32 : i32 to vector<1x256xi32>
    %26 = arith.cmpi sge, %2, %25 : vector<1x256xi32>
    %c0_7 = arith.constant 0 : index
    %c0_8 = arith.constant 0 : index
    %c0_9 = arith.constant 0 : index
    %27 = vector.load %arg2[%c0_7, %c0_8, %c0_9] : memref<9x4x4xf32, #tpu.memory_space<vmem>>, vector<9x4x4xf32>
    %c0_10 = arith.constant 0 : index
    %c0_11 = arith.constant 0 : index
    %c0_12 = arith.constant 0 : index
    %28 = vector.load %arg3[%c0_10, %c0_11, %c0_12] : memref<9x4x4xf32, #tpu.memory_space<vmem>>, vector<9x4x4xf32>
    %c16_i32_13 = arith.constant 16 : i32
    %29 = tpu.dynamic_rotate %1 by %c16_i32_13 dim 1 : vector<4x256xf32>, i32 -> vector<4x256xf32>
    %c240_i32_14 = arith.constant 240 : i32
    %30 = tpu.dynamic_rotate %1 by %c240_i32_14 dim 1 : vector<4x256xf32>, i32 -> vector<4x256xf32>
    %31 = vector.shape_cast %24 : vector<1x256xi1> to vector<1x256xi1>
    %32 = vector.broadcast %31 : vector<1x256xi1> to vector<4x256xi1>
    %33 = arith.select %32, %30, %29 : vector<4x256xi1>, vector<4x256xf32>
    %34 = vector.shape_cast %26 : vector<1x256xi1> to vector<1x256xi1>
    %35 = vector.broadcast %34 : vector<1x256xi1> to vector<4x256xi1>
    %36 = arith.select %35, %29, %30 : vector<4x256xi1>, vector<4x256xf32>
    %c1_i32_15 = arith.constant 1 : i32
    %37 = tpu.dynamic_rotate %33 by %c1_i32_15 dim 1 : vector<4x256xf32>, i32 -> vector<4x256xf32>
    %c255_i32 = arith.constant 255 : i32
    %38 = tpu.dynamic_rotate %33 by %c255_i32 dim 1 : vector<4x256xf32>, i32 -> vector<4x256xf32>
    %39 = vector.shape_cast %20 : vector<1x256xi1> to vector<1x256xi1>
    %40 = vector.broadcast %39 : vector<1x256xi1> to vector<4x256xi1>
    %41 = arith.select %40, %38, %37 : vector<4x256xi1>, vector<4x256xf32>
    %42 = vector.shape_cast %22 : vector<1x256xi1> to vector<1x256xi1>
    %43 = vector.broadcast %42 : vector<1x256xi1> to vector<4x256xi1>
    %44 = arith.select %43, %37, %38 : vector<4x256xi1>, vector<4x256xf32>
    %c1_i32_16 = arith.constant 1 : i32
    %45 = tpu.dynamic_rotate %1 by %c1_i32_16 dim 1 : vector<4x256xf32>, i32 -> vector<4x256xf32>
    %c255_i32_17 = arith.constant 255 : i32
    %46 = tpu.dynamic_rotate %1 by %c255_i32_17 dim 1 : vector<4x256xf32>, i32 -> vector<4x256xf32>
    %47 = vector.shape_cast %20 : vector<1x256xi1> to vector<1x256xi1>
    %48 = vector.broadcast %47 : vector<1x256xi1> to vector<4x256xi1>
    %49 = arith.select %48, %46, %45 : vector<4x256xi1>, vector<4x256xf32>
    %50 = vector.shape_cast %22 : vector<1x256xi1> to vector<1x256xi1>
    %51 = vector.broadcast %50 : vector<1x256xi1> to vector<4x256xi1>
    %52 = arith.select %51, %45, %46 : vector<4x256xi1>, vector<4x256xf32>
    %c1_i32_18 = arith.constant 1 : i32
    %53 = tpu.dynamic_rotate %36 by %c1_i32_18 dim 1 : vector<4x256xf32>, i32 -> vector<4x256xf32>
    %c255_i32_19 = arith.constant 255 : i32
    %54 = tpu.dynamic_rotate %36 by %c255_i32_19 dim 1 : vector<4x256xf32>, i32 -> vector<4x256xf32>
    %55 = vector.shape_cast %20 : vector<1x256xi1> to vector<1x256xi1>
    %56 = vector.broadcast %55 : vector<1x256xi1> to vector<4x256xi1>
    %57 = arith.select %56, %54, %53 : vector<4x256xi1>, vector<4x256xf32>
    %58 = vector.shape_cast %22 : vector<1x256xi1> to vector<1x256xi1>
    %59 = vector.broadcast %58 : vector<1x256xi1> to vector<4x256xi1>
    %60 = arith.select %59, %53, %54 : vector<4x256xi1>, vector<4x256xf32>
    %cst = arith.constant 0.000000e+00 : f32
    %61 = vector.broadcast %cst : f32 to vector<4x256xf32>
    %62 = vector.extract_strided_slice %27 {offsets = [0, 0, 0], sizes = [1, 4, 4], strides = [1, 1, 1]} : vector<9x4x4xf32> to vector<1x4x4xf32>
    %63 = vector.shape_cast %62 : vector<1x4x4xf32> to vector<4x4xf32>
    %cst_20 = arith.constant dense<0.000000e+00> : vector<4x256xf32>
    %64 = tpu.matmul %63, %41, %cst_20 {dimension_numbers = #tpu.dot_dimension_numbers<[1], [0], [0], [1], [0, 0, 1, 1], [], []>} : vector<4x4xf32>, vector<4x256xf32>, vector<4x256xf32> -> vector<4x256xf32>
    %65 = arith.addf %61, %64 : vector<4x256xf32>
    %66 = vector.extract_strided_slice %27 {offsets = [1, 0, 0], sizes = [1, 4, 4], strides = [1, 1, 1]} : vector<9x4x4xf32> to vector<1x4x4xf32>
    %67 = vector.shape_cast %66 : vector<1x4x4xf32> to vector<4x4xf32>
    %cst_21 = arith.constant dense<0.000000e+00> : vector<4x256xf32>
    %68 = tpu.matmul %67, %33, %cst_21 {dimension_numbers = #tpu.dot_dimension_numbers<[1], [0], [0], [1], [0, 0, 1, 1], [], []>} : vector<4x4xf32>, vector<4x256xf32>, vector<4x256xf32> -> vector<4x256xf32>
    %69 = arith.addf %65, %68 : vector<4x256xf32>
    %70 = vector.extract_strided_slice %27 {offsets = [2, 0, 0], sizes = [1, 4, 4], strides = [1, 1, 1]} : vector<9x4x4xf32> to vector<1x4x4xf32>
    %71 = vector.shape_cast %70 : vector<1x4x4xf32> to vector<4x4xf32>
    %cst_22 = arith.constant dense<0.000000e+00> : vector<4x256xf32>
    %72 = tpu.matmul %71, %44, %cst_22 {dimension_numbers = #tpu.dot_dimension_numbers<[1], [0], [0], [1], [0, 0, 1, 1], [], []>} : vector<4x4xf32>, vector<4x256xf32>, vector<4x256xf32> -> vector<4x256xf32>
    %73 = arith.addf %69, %72 : vector<4x256xf32>
    %74 = vector.extract_strided_slice %27 {offsets = [3, 0, 0], sizes = [1, 4, 4], strides = [1, 1, 1]} : vector<9x4x4xf32> to vector<1x4x4xf32>
    %75 = vector.shape_cast %74 : vector<1x4x4xf32> to vector<4x4xf32>
    %cst_23 = arith.constant dense<0.000000e+00> : vector<4x256xf32>
    %76 = tpu.matmul %75, %49, %cst_23 {dimension_numbers = #tpu.dot_dimension_numbers<[1], [0], [0], [1], [0, 0, 1, 1], [], []>} : vector<4x4xf32>, vector<4x256xf32>, vector<4x256xf32> -> vector<4x256xf32>
    %77 = arith.addf %73, %76 : vector<4x256xf32>
    %78 = vector.extract_strided_slice %27 {offsets = [4, 0, 0], sizes = [1, 4, 4], strides = [1, 1, 1]} : vector<9x4x4xf32> to vector<1x4x4xf32>
    %79 = vector.shape_cast %78 : vector<1x4x4xf32> to vector<4x4xf32>
    %cst_24 = arith.constant dense<0.000000e+00> : vector<4x256xf32>
    %80 = tpu.matmul %79, %1, %cst_24 {dimension_numbers = #tpu.dot_dimension_numbers<[1], [0], [0], [1], [0, 0, 1, 1], [], []>} : vector<4x4xf32>, vector<4x256xf32>, vector<4x256xf32> -> vector<4x256xf32>
    %81 = arith.addf %77, %80 : vector<4x256xf32>
    %82 = vector.extract_strided_slice %27 {offsets = [5, 0, 0], sizes = [1, 4, 4], strides = [1, 1, 1]} : vector<9x4x4xf32> to vector<1x4x4xf32>
    %83 = vector.shape_cast %82 : vector<1x4x4xf32> to vector<4x4xf32>
    %cst_25 = arith.constant dense<0.000000e+00> : vector<4x256xf32>
    %84 = tpu.matmul %83, %52, %cst_25 {dimension_numbers = #tpu.dot_dimension_numbers<[1], [0], [0], [1], [0, 0, 1, 1], [], []>} : vector<4x4xf32>, vector<4x256xf32>, vector<4x256xf32> -> vector<4x256xf32>
    %85 = arith.addf %81, %84 : vector<4x256xf32>
    %86 = vector.extract_strided_slice %27 {offsets = [6, 0, 0], sizes = [1, 4, 4], strides = [1, 1, 1]} : vector<9x4x4xf32> to vector<1x4x4xf32>
    %87 = vector.shape_cast %86 : vector<1x4x4xf32> to vector<4x4xf32>
    %cst_26 = arith.constant dense<0.000000e+00> : vector<4x256xf32>
    %88 = tpu.matmul %87, %57, %cst_26 {dimension_numbers = #tpu.dot_dimension_numbers<[1], [0], [0], [1], [0, 0, 1, 1], [], []>} : vector<4x4xf32>, vector<4x256xf32>, vector<4x256xf32> -> vector<4x256xf32>
    %89 = arith.addf %85, %88 : vector<4x256xf32>
    %90 = vector.extract_strided_slice %27 {offsets = [7, 0, 0], sizes = [1, 4, 4], strides = [1, 1, 1]} : vector<9x4x4xf32> to vector<1x4x4xf32>
    %91 = vector.shape_cast %90 : vector<1x4x4xf32> to vector<4x4xf32>
    %cst_27 = arith.constant dense<0.000000e+00> : vector<4x256xf32>
    %92 = tpu.matmul %91, %36, %cst_27 {dimension_numbers = #tpu.dot_dimension_numbers<[1], [0], [0], [1], [0, 0, 1, 1], [], []>} : vector<4x4xf32>, vector<4x256xf32>, vector<4x256xf32> -> vector<4x256xf32>
    %93 = arith.addf %89, %92 : vector<4x256xf32>
    %94 = vector.extract_strided_slice %27 {offsets = [8, 0, 0], sizes = [1, 4, 4], strides = [1, 1, 1]} : vector<9x4x4xf32> to vector<1x4x4xf32>
    %95 = vector.shape_cast %94 : vector<1x4x4xf32> to vector<4x4xf32>
    %cst_28 = arith.constant dense<0.000000e+00> : vector<4x256xf32>
    %96 = tpu.matmul %95, %60, %cst_28 {dimension_numbers = #tpu.dot_dimension_numbers<[1], [0], [0], [1], [0, 0, 1, 1], [], []>} : vector<4x4xf32>, vector<4x256xf32>, vector<4x256xf32> -> vector<4x256xf32>
    %97 = arith.addf %93, %96 : vector<4x256xf32>
    %cst_29 = arith.constant dense<0.000000e+00> : vector<4xf32>
    %98 = vector.multi_reduction <add>, %97, %cst_29 [1] : vector<4x256xf32> to vector<4xf32>
    %99 = vector.shape_cast %98 : vector<4xf32> to vector<4x1xf32>
    %cst_30 = arith.constant 3.906250e-03 : f32
    %100 = vector.broadcast %cst_30 : f32 to vector<4x1xf32>
    %101 = arith.mulf %99, %100 : vector<4x1xf32>
    %102 = arith.mulf %97, %97 : vector<4x256xf32>
    %cst_31 = arith.constant dense<0.000000e+00> : vector<4xf32>
    %103 = vector.multi_reduction <add>, %102, %cst_31 [1] : vector<4x256xf32> to vector<4xf32>
    %104 = vector.shape_cast %103 : vector<4xf32> to vector<4x1xf32>
    %cst_32 = arith.constant 3.906250e-03 : f32
    %105 = vector.broadcast %cst_32 : f32 to vector<4x1xf32>
    %106 = arith.mulf %104, %105 : vector<4x1xf32>
    %107 = arith.mulf %101, %101 : vector<4x1xf32>
    %108 = arith.subf %106, %107 : vector<4x1xf32>
    %cst_33 = arith.constant 0.000000e+00 : f32
    %109 = vector.broadcast %cst_33 : f32 to vector<4x1xf32>
    %110 = arith.maximumf %108, %109 : vector<4x1xf32>
    %111 = vector.broadcast %101 : vector<4x1xf32> to vector<4x256xf32>
    %112 = arith.subf %97, %111 : vector<4x256xf32>
    %cst_34 = arith.constant 9.99999974E-6 : f32
    %113 = vector.broadcast %cst_34 : f32 to vector<4x1xf32>
    %114 = arith.addf %110, %113 : vector<4x1xf32>
    %115 = math.rsqrt %114 : vector<4x1xf32>
    %116 = vector.broadcast %115 : vector<4x1xf32> to vector<4x256xf32>
    %117 = arith.mulf %112, %116 : vector<4x256xf32>
    %cst_35 = arith.constant 0.000000e+00 : f32
    %118 = vector.broadcast %cst_35 : f32 to vector<4x256xf32>
    %119 = arith.maximumf %117, %118 : vector<4x256xf32>
    %c16_i32_36 = arith.constant 16 : i32
    %120 = tpu.dynamic_rotate %119 by %c16_i32_36 dim 1 : vector<4x256xf32>, i32 -> vector<4x256xf32>
    %c240_i32_37 = arith.constant 240 : i32
    %121 = tpu.dynamic_rotate %119 by %c240_i32_37 dim 1 : vector<4x256xf32>, i32 -> vector<4x256xf32>
    %122 = vector.shape_cast %24 : vector<1x256xi1> to vector<1x256xi1>
    %123 = vector.broadcast %122 : vector<1x256xi1> to vector<4x256xi1>
    %124 = arith.select %123, %121, %120 : vector<4x256xi1>, vector<4x256xf32>
    %125 = vector.shape_cast %26 : vector<1x256xi1> to vector<1x256xi1>
    %126 = vector.broadcast %125 : vector<1x256xi1> to vector<4x256xi1>
    %127 = arith.select %126, %120, %121 : vector<4x256xi1>, vector<4x256xf32>
    %c1_i32_38 = arith.constant 1 : i32
    %128 = tpu.dynamic_rotate %124 by %c1_i32_38 dim 1 : vector<4x256xf32>, i32 -> vector<4x256xf32>
    %c255_i32_39 = arith.constant 255 : i32
    %129 = tpu.dynamic_rotate %124 by %c255_i32_39 dim 1 : vector<4x256xf32>, i32 -> vector<4x256xf32>
    %130 = vector.shape_cast %20 : vector<1x256xi1> to vector<1x256xi1>
    %131 = vector.broadcast %130 : vector<1x256xi1> to vector<4x256xi1>
    %132 = arith.select %131, %129, %128 : vector<4x256xi1>, vector<4x256xf32>
    %133 = vector.shape_cast %22 : vector<1x256xi1> to vector<1x256xi1>
    %134 = vector.broadcast %133 : vector<1x256xi1> to vector<4x256xi1>
    %135 = arith.select %134, %128, %129 : vector<4x256xi1>, vector<4x256xf32>
    %c1_i32_40 = arith.constant 1 : i32
    %136 = tpu.dynamic_rotate %119 by %c1_i32_40 dim 1 : vector<4x256xf32>, i32 -> vector<4x256xf32>
    %c255_i32_41 = arith.constant 255 : i32
    %137 = tpu.dynamic_rotate %119 by %c255_i32_41 dim 1 : vector<4x256xf32>, i32 -> vector<4x256xf32>
    %138 = vector.shape_cast %20 : vector<1x256xi1> to vector<1x256xi1>
    %139 = vector.broadcast %138 : vector<1x256xi1> to vector<4x256xi1>
    %140 = arith.select %139, %137, %136 : vector<4x256xi1>, vector<4x256xf32>
    %141 = vector.shape_cast %22 : vector<1x256xi1> to vector<1x256xi1>
    %142 = vector.broadcast %141 : vector<1x256xi1> to vector<4x256xi1>
    %143 = arith.select %142, %136, %137 : vector<4x256xi1>, vector<4x256xf32>
    %c1_i32_42 = arith.constant 1 : i32
    %144 = tpu.dynamic_rotate %127 by %c1_i32_42 dim 1 : vector<4x256xf32>, i32 -> vector<4x256xf32>
    %c255_i32_43 = arith.constant 255 : i32
    %145 = tpu.dynamic_rotate %127 by %c255_i32_43 dim 1 : vector<4x256xf32>, i32 -> vector<4x256xf32>
    %146 = vector.shape_cast %20 : vector<1x256xi1> to vector<1x256xi1>
    %147 = vector.broadcast %146 : vector<1x256xi1> to vector<4x256xi1>
    %148 = arith.select %147, %145, %144 : vector<4x256xi1>, vector<4x256xf32>
    %149 = vector.shape_cast %22 : vector<1x256xi1> to vector<1x256xi1>
    %150 = vector.broadcast %149 : vector<1x256xi1> to vector<4x256xi1>
    %151 = arith.select %150, %144, %145 : vector<4x256xi1>, vector<4x256xf32>
    %cst_44 = arith.constant 0.000000e+00 : f32
    %152 = vector.broadcast %cst_44 : f32 to vector<4x256xf32>
    %153 = vector.extract_strided_slice %28 {offsets = [0, 0, 0], sizes = [1, 4, 4], strides = [1, 1, 1]} : vector<9x4x4xf32> to vector<1x4x4xf32>
    %154 = vector.shape_cast %153 : vector<1x4x4xf32> to vector<4x4xf32>
    %cst_45 = arith.constant dense<0.000000e+00> : vector<4x256xf32>
    %155 = tpu.matmul %154, %132, %cst_45 {dimension_numbers = #tpu.dot_dimension_numbers<[1], [0], [0], [1], [0, 0, 1, 1], [], []>} : vector<4x4xf32>, vector<4x256xf32>, vector<4x256xf32> -> vector<4x256xf32>
    %156 = arith.addf %152, %155 : vector<4x256xf32>
    %157 = vector.extract_strided_slice %28 {offsets = [1, 0, 0], sizes = [1, 4, 4], strides = [1, 1, 1]} : vector<9x4x4xf32> to vector<1x4x4xf32>
    %158 = vector.shape_cast %157 : vector<1x4x4xf32> to vector<4x4xf32>
    %cst_46 = arith.constant dense<0.000000e+00> : vector<4x256xf32>
    %159 = tpu.matmul %158, %124, %cst_46 {dimension_numbers = #tpu.dot_dimension_numbers<[1], [0], [0], [1], [0, 0, 1, 1], [], []>} : vector<4x4xf32>, vector<4x256xf32>, vector<4x256xf32> -> vector<4x256xf32>
    %160 = arith.addf %156, %159 : vector<4x256xf32>
    %161 = vector.extract_strided_slice %28 {offsets = [2, 0, 0], sizes = [1, 4, 4], strides = [1, 1, 1]} : vector<9x4x4xf32> to vector<1x4x4xf32>
    %162 = vector.shape_cast %161 : vector<1x4x4xf32> to vector<4x4xf32>
    %cst_47 = arith.constant dense<0.000000e+00> : vector<4x256xf32>
    %163 = tpu.matmul %162, %135, %cst_47 {dimension_numbers = #tpu.dot_dimension_numbers<[1], [0], [0], [1], [0, 0, 1, 1], [], []>} : vector<4x4xf32>, vector<4x256xf32>, vector<4x256xf32> -> vector<4x256xf32>
    %164 = arith.addf %160, %163 : vector<4x256xf32>
    %165 = vector.extract_strided_slice %28 {offsets = [3, 0, 0], sizes = [1, 4, 4], strides = [1, 1, 1]} : vector<9x4x4xf32> to vector<1x4x4xf32>
    %166 = vector.shape_cast %165 : vector<1x4x4xf32> to vector<4x4xf32>
    %cst_48 = arith.constant dense<0.000000e+00> : vector<4x256xf32>
    %167 = tpu.matmul %166, %140, %cst_48 {dimension_numbers = #tpu.dot_dimension_numbers<[1], [0], [0], [1], [0, 0, 1, 1], [], []>} : vector<4x4xf32>, vector<4x256xf32>, vector<4x256xf32> -> vector<4x256xf32>
    %168 = arith.addf %164, %167 : vector<4x256xf32>
    %169 = vector.extract_strided_slice %28 {offsets = [4, 0, 0], sizes = [1, 4, 4], strides = [1, 1, 1]} : vector<9x4x4xf32> to vector<1x4x4xf32>
    %170 = vector.shape_cast %169 : vector<1x4x4xf32> to vector<4x4xf32>
    %cst_49 = arith.constant dense<0.000000e+00> : vector<4x256xf32>
    %171 = tpu.matmul %170, %119, %cst_49 {dimension_numbers = #tpu.dot_dimension_numbers<[1], [0], [0], [1], [0, 0, 1, 1], [], []>} : vector<4x4xf32>, vector<4x256xf32>, vector<4x256xf32> -> vector<4x256xf32>
    %172 = arith.addf %168, %171 : vector<4x256xf32>
    %173 = vector.extract_strided_slice %28 {offsets = [5, 0, 0], sizes = [1, 4, 4], strides = [1, 1, 1]} : vector<9x4x4xf32> to vector<1x4x4xf32>
    %174 = vector.shape_cast %173 : vector<1x4x4xf32> to vector<4x4xf32>
    %cst_50 = arith.constant dense<0.000000e+00> : vector<4x256xf32>
    %175 = tpu.matmul %174, %143, %cst_50 {dimension_numbers = #tpu.dot_dimension_numbers<[1], [0], [0], [1], [0, 0, 1, 1], [], []>} : vector<4x4xf32>, vector<4x256xf32>, vector<4x256xf32> -> vector<4x256xf32>
    %176 = arith.addf %172, %175 : vector<4x256xf32>
    %177 = vector.extract_strided_slice %28 {offsets = [6, 0, 0], sizes = [1, 4, 4], strides = [1, 1, 1]} : vector<9x4x4xf32> to vector<1x4x4xf32>
    %178 = vector.shape_cast %177 : vector<1x4x4xf32> to vector<4x4xf32>
    %cst_51 = arith.constant dense<0.000000e+00> : vector<4x256xf32>
    %179 = tpu.matmul %178, %148, %cst_51 {dimension_numbers = #tpu.dot_dimension_numbers<[1], [0], [0], [1], [0, 0, 1, 1], [], []>} : vector<4x4xf32>, vector<4x256xf32>, vector<4x256xf32> -> vector<4x256xf32>
    %180 = arith.addf %176, %179 : vector<4x256xf32>
    %181 = vector.extract_strided_slice %28 {offsets = [7, 0, 0], sizes = [1, 4, 4], strides = [1, 1, 1]} : vector<9x4x4xf32> to vector<1x4x4xf32>
    %182 = vector.shape_cast %181 : vector<1x4x4xf32> to vector<4x4xf32>
    %cst_52 = arith.constant dense<0.000000e+00> : vector<4x256xf32>
    %183 = tpu.matmul %182, %127, %cst_52 {dimension_numbers = #tpu.dot_dimension_numbers<[1], [0], [0], [1], [0, 0, 1, 1], [], []>} : vector<4x4xf32>, vector<4x256xf32>, vector<4x256xf32> -> vector<4x256xf32>
    %184 = arith.addf %180, %183 : vector<4x256xf32>
    %185 = vector.extract_strided_slice %28 {offsets = [8, 0, 0], sizes = [1, 4, 4], strides = [1, 1, 1]} : vector<9x4x4xf32> to vector<1x4x4xf32>
    %186 = vector.shape_cast %185 : vector<1x4x4xf32> to vector<4x4xf32>
    %cst_53 = arith.constant dense<0.000000e+00> : vector<4x256xf32>
    %187 = tpu.matmul %186, %151, %cst_53 {dimension_numbers = #tpu.dot_dimension_numbers<[1], [0], [0], [1], [0, 0, 1, 1], [], []>} : vector<4x4xf32>, vector<4x256xf32>, vector<4x256xf32> -> vector<4x256xf32>
    %188 = arith.addf %184, %187 : vector<4x256xf32>
    %cst_54 = arith.constant dense<0.000000e+00> : vector<4xf32>
    %189 = vector.multi_reduction <add>, %188, %cst_54 [1] : vector<4x256xf32> to vector<4xf32>
    %190 = vector.shape_cast %189 : vector<4xf32> to vector<4x1xf32>
    %cst_55 = arith.constant 3.906250e-03 : f32
    %191 = vector.broadcast %cst_55 : f32 to vector<4x1xf32>
    %192 = arith.mulf %190, %191 : vector<4x1xf32>
    %193 = arith.mulf %188, %188 : vector<4x256xf32>
    %cst_56 = arith.constant dense<0.000000e+00> : vector<4xf32>
    %194 = vector.multi_reduction <add>, %193, %cst_56 [1] : vector<4x256xf32> to vector<4xf32>
    %195 = vector.shape_cast %194 : vector<4xf32> to vector<4x1xf32>
    %cst_57 = arith.constant 3.906250e-03 : f32
    %196 = vector.broadcast %cst_57 : f32 to vector<4x1xf32>
    %197 = arith.mulf %195, %196 : vector<4x1xf32>
    %198 = arith.mulf %192, %192 : vector<4x1xf32>
    %199 = arith.subf %197, %198 : vector<4x1xf32>
    %cst_58 = arith.constant 0.000000e+00 : f32
    %200 = vector.broadcast %cst_58 : f32 to vector<4x1xf32>
    %201 = arith.maximumf %199, %200 : vector<4x1xf32>
    %202 = vector.broadcast %192 : vector<4x1xf32> to vector<4x256xf32>
    %203 = arith.subf %188, %202 : vector<4x256xf32>
    %cst_59 = arith.constant 9.99999974E-6 : f32
    %204 = vector.broadcast %cst_59 : f32 to vector<4x1xf32>
    %205 = arith.addf %201, %204 : vector<4x1xf32>
    %206 = math.rsqrt %205 : vector<4x1xf32>
    %207 = vector.broadcast %206 : vector<4x1xf32> to vector<4x256xf32>
    %208 = arith.mulf %203, %207 : vector<4x256xf32>
    %209 = arith.addf %1, %208 : vector<4x256xf32>
    %c0_60 = arith.constant 0 : index
    %c0_61 = arith.constant 0 : index
    %c0_62 = arith.constant 0 : index
    %210 = vector.load %arg4[%c0_60, %c0_61, %c0_62] : memref<1x4x256xf32, #tpu.memory_space<vmem>>, vector<1x4x256xf32>
    %211 = vector.shape_cast %210 : vector<1x4x256xf32> to vector<4x256xf32>
    %212 = vector.shape_cast %209 : vector<4x256xf32> to vector<1x4x256xf32>
    tpu.vector_store %arg4[%c0_60, %c0_61, %c0_62], %212 {strides = array<i32>} : memref<1x4x256xf32, #tpu.memory_space<vmem>>, vector<1x4x256xf32>,
    return
  }
  func.func @transform_0(%arg0: i32) -> (i32, i32, i32) {
    %c0_i32 = arith.constant 0 : i32
    %c0_i32_0 = arith.constant 0 : i32
    %c0_i32_1 = arith.constant 0 : i32
    return %arg0, %c0_i32, %c0_i32_0 : i32, i32, i32
  }
  func.func @transform_1(%arg0: i32) -> (i32, i32, i32) {
    %c0_i32 = arith.constant 0 : i32
    %c0_i32_0 = arith.constant 0 : i32
    %c0_i32_1 = arith.constant 0 : i32
    %c0_i32_2 = arith.constant 0 : i32
    return %c0_i32, %c0_i32_0, %c0_i32_1 : i32, i32, i32
  }
  func.func @transform_2(%arg0: i32) -> (i32, i32, i32) {
    %c0_i32 = arith.constant 0 : i32
    %c0_i32_0 = arith.constant 0 : i32
    %c0_i32_1 = arith.constant 0 : i32
    %c0_i32_2 = arith.constant 0 : i32
    return %c0_i32, %c0_i32_0, %c0_i32_1 : i32, i32, i32
  }
  func.func @transform_3(%arg0: i32) -> (i32, i32, i32) {
    %c0_i32 = arith.constant 0 : i32
    %c0_i32_0 = arith.constant 0 : i32
    %c0_i32_1 = arith.constant 0 : i32
    return %arg0, %c0_i32, %c0_i32_0 : i32, i32, i32
  }
}

</mosaic_0001>

<llo_original>
// kernel: tpu_custom_call.1
$region0: #{tpu_custom_call.1}
  #allocation0 [shape = 'u32[]', space=smem, size = 0x4, offset = 0x4, fixed_abs, tag = 'smem constant byte address 0x4 - core index']
  #allocation1 [shape = 'u32[144,128]{1,0:T(1,128)}', space=vmem, size = 0x12000, scoped, tag = 'internal scratch']
  %s0 = inlined_call_operand.vmem [shape: f32[2,4,256], index: 0, kind: input, shape index: {}]
  %s1 = inlined_call_operand.vmem [shape: f32[9,4,4], index: 1, kind: input, shape index: {}]
  %s2 = inlined_call_operand.vmem [shape: f32[9,4,4], index: 2, kind: input, shape index: {}]
  %s3 = inlined_call_operand.hbm [shape: f32[2,4,256], index: 3, kind: output, shape index: {}]
  %s4 = sld [smem:[#allocation0]]
  $region45: #{tpu_custom_call.1} parent=0
    _
  %s6 = ssub.s32 1, %s4
  %s7 = scalar_select 0, %s6, %s4
  $region1: #{tpu_custom_call.1} parent=0
    #allocation2 [shape = 'u8[8192]{0}', space=vmem, size = 0x2000, scoped, tag = 'output window, operand 0']
    #allocation3 [shape = 's32[2]{0}', space=sflag, size = 0x8, scoped, tag = 'scoped memory for tpu_custom_call.1']
    %8 = vsyncpa [#allocation3], 0
    %s9 = scalar_lea.sflag [#allocation3], 1
    %10 = vsyncpa %s9, 0
    loop: start=0, step=1, limit=4
    $region2: #{tpu_custom_call.1} parent=1 // loop_pre_header
      _
    $region3: #{tpu_custom_call.1} parent=1 // loop_header
      %s12 = sphi 0, %s16
      %p13 = scmp.ge.s32.totalorder %s12, 4
      %s22 = sphi 0, %s24
      %s25 = sphi 0, %s22
      %s26 = sphi 0, %s25
      %s42 = sphi 0, %s26
      %s46 = sphi 0, %s46
      %s48 = sphi 0, %s46
      %s49 = sphi 0, %s48
      %s63 = sphi 0, %s49
      %s67 = sphi 0, %s67
      %s69 = sphi 0, %s67
      %s70 = sphi 0, %s69
      %s84 = sphi 0, %s70
      %s90 = sphi 0, %s92
      %s93 = sphi 0, %s90
      %s94 = sphi 0, %s93
      %s110 = sphi 0, %s94
    $region4: #{tpu_custom_call.1} parent=1 // loop_header_branch
      %15 = sbr.rel (%p13) target = $region8
    $region5: #{tpu_custom_call.1} parent=1 // loop_body
      %s17 = ssub.s32 %s12, 1
      %s18 = ssub.s32 %s12, 2
      %s19 = sadd.s32 %s12, 1
      %s20 = ssub.s32 %s12, %s19
      %p21 = scmp.eq.s32.totalorder %s20, 0
      %s23 = sadd.s32 %s22, 1
      %s24 = scalar_select %p21, %s22, %s23
      %p27 = pneg %p21
      %p28 = scmp.eq.s32.totalorder %s12, 1
      %p29 = por %p27, %p28
      %p30 = scmp.ne.s32.totalorder %s22, %s25
      %p31 = scmp.eq.s32.totalorder %s12, 0
      %p32 = por %p30, %p31
      %p33 = scmp.ne.s32.totalorder %s22, %s25
      %p34 = scmp.eq.s32.totalorder %s17, 1
      %p35 = por %p33, %p34
      %p36 = scmp.ne.s32.totalorder %s25, %s26
      %p37 = scmp.eq.s32.totalorder %s17, 0
      %p38 = por %p36, %p37
      %p39 = scmp.ne.s32.totalorder %s25, %s26
      %p40 = scmp.eq.s32.totalorder %s18, 1
      %p41 = por %p39, %p40
      %p43 = scmp.ne.s32.totalorder %s26, %s42
      %p44 = scmp.eq.s32.totalorder %s18, 0
      %p45 = por %p43, %p44
      %s47 = sadd.s32 %s46, 1
      %p50 = scmp.eq.s32.totalorder %s12, 1
      %p51 = scmp.ne.s32.totalorder %s46, %s48
      %p52 = scmp.eq.s32.totalorder %s12, 0
      %p53 = por %p51, %p52
      %p54 = scmp.ne.s32.totalorder %s46, %s48
      %p55 = scmp.eq.s32.totalorder %s17, 1
      %p56 = por %p54, %p55
      %p57 = scmp.ne.s32.totalorder %s48, %s49
      %p58 = scmp.eq.s32.totalorder %s17, 0
      %p59 = por %p57, %p58
      %p60 = scmp.ne.s32.totalorder %s48, %s49
      %p61 = scmp.eq.s32.totalorder %s18, 1
      %p62 = por %p60, %p61
      %p64 = scmp.ne.s32.totalorder %s49, %s63
      %p65 = scmp.eq.s32.totalorder %s18, 0
      %p66 = por %p64, %p65
      %s68 = sadd.s32 %s67, 1
      %p71 = scmp.eq.s32.totalorder %s12, 1
      %p72 = scmp.ne.s32.totalorder %s67, %s69
      %p73 = scmp.eq.s32.totalorder %s12, 0
      %p74 = por %p72, %p73
      %p75 = scmp.ne.s32.totalorder %s67, %s69
      %p76 = scmp.eq.s32.totalorder %s17, 1
      %p77 = por %p75, %p76
      %p78 = scmp.ne.s32.totalorder %s69, %s70
      %p79 = scmp.eq.s32.totalorder %s17, 0
      %p80 = por %p78, %p79
      %p81 = scmp.ne.s32.totalorder %s69, %s70
      %p82 = scmp.eq.s32.totalorder %s18, 1
      %p83 = por %p81, %p82
      %p85 = scmp.ne.s32.totalorder %s70, %s84
      %p86 = scmp.eq.s32.totalorder %s18, 0
      %p87 = por %p85, %p86
      %s88 = ssub.s32 %s12, %s19
      %p89 = scmp.eq.s32.totalorder %s88, 0
      %s91 = sadd.s32 %s90, 1
      %s92 = scalar_select %p89, %s90, %s91
      %p95 = pneg %p89
      %p96 = scmp.eq.s32.totalorder %s12, 1
      %p97 = por %p95, %p96
      %p98 = scmp.ne.s32.totalorder %s90, %s93
      %p99 = scmp.eq.s32.totalorder %s12, 0
      %p100 = por %p98, %p99
      %p101 = scmp.ne.s32.totalorder %s90, %s93
      %p102 = scmp.eq.s32.totalorder %s17, 1
      %p103 = por %p101, %p102
      %p104 = scmp.ne.s32.totalorder %s93, %s94
      %p105 = scmp.eq.s32.totalorder %s17, 0
      %p106 = por %p104, %p105
      %p107 = scmp.ne.s32.totalorder %s93, %s94
      %p108 = scmp.eq.s32.totalorder %s18, 1
      %p109 = por %p107, %p108
      %p111 = scmp.ne.s32.totalorder %s94, %s110
      %p112 = scmp.eq.s32.totalorder %s18, 0
      %p113 = por %p111, %p112
      %p114 = scmp.le.s32.totalorder 1, %s12
      %p115 = scmp.lt.s32.totalorder %s12, 3
      %p116 = pnand %p114, %p115
      %p117 = pneg %p116
      // Predicated region
      $region9: #{tpu_custom_call.1} parent=5 // pred_check
        _
      $region10: #{tpu_custom_call.1} parent=5 // pred_check_branch
        %119 = sbr.rel (%p116) target = $region12
      $region11: #{tpu_custom_call.1} parent=5 // pred_region
        %s120 = ssub.s32 %s12, 1
        // Predicated region
        $region13: #{tpu_custom_call.1} parent=11 // pred_check
          %p121 = pneg %p59
        $region14: #{tpu_custom_call.1} parent=11 // pred_check_branch
          %123 = sbr.rel (%p121) target = $region16
        $region15: #{tpu_custom_call.1} parent=11 // pred_region
          _
        $region16: #{tpu_custom_call.1} parent=11 // pred_fallthru
          _
        // Predicated region
        $region17: #{tpu_custom_call.1} parent=11 // pred_check
          %p124 = pneg %p80
        $region18: #{tpu_custom_call.1} parent=11 // pred_check_branch
          %126 = sbr.rel (%p124) target = $region20
        $region19: #{tpu_custom_call.1} parent=11 // pred_region
          _
        $region20: #{tpu_custom_call.1} parent=11 // pred_fallthru
          _
      $region12: #{tpu_custom_call.1} parent=5 // pred_fallthru
        _
      %p127 = scmp.lt.s32.totalorder %s12, 2
      // Predicated region
      $region21: #{tpu_custom_call.1} parent=5 // pred_check
        %p128 = pneg %p127
      $region22: #{tpu_custom_call.1} parent=5 // pred_check_branch
        %130 = sbr.rel (%p128) target = $region24
      $region23: #{tpu_custom_call.1} parent=5 // pred_region
        // Predicated region
        $region25: #{tpu_custom_call.1} parent=23 // pred_check
          %p131 = pneg %p32
        $region26: #{tpu_custom_call.1} parent=23 // pred_check_branch
          %133 = sbr.rel (%p131) target = $region28
        $region27: #{tpu_custom_call.1} parent=23 // pred_region
          %p134 = scmp.lt.s32.totalorder %s12, 1
          %s135 = scalar_select %p134, %s12, 1
          %s136 = smul.addr %s135, 2
          %s137 = smul.addr %s136, 4
          %s138 = scalar_lea.vmem %s0, %s137
        $region28: #{tpu_custom_call.1} parent=23 // pred_fallthru
          _
      $region24: #{tpu_custom_call.1} parent=5 // pred_fallthru
        _
      %p139 = scmp.le.s32.totalorder 1, %s12
      %p140 = scmp.lt.s32.totalorder %s12, 3
      %p141 = pnand %p139, %p140
      %p142 = pneg %p141
      // Predicated region
      $region29: #{tpu_custom_call.1} parent=5 // pred_check
        _
      $region30: #{tpu_custom_call.1} parent=5 // pred_check_branch
        %144 = sbr.rel (%p141) target = $region32
      $region31: #{tpu_custom_call.1} parent=5 // pred_region
        %s145 = ssub.s32 %s12, 1
        %p146 = scmp.lt.s32.totalorder %s17, 1
        %s147 = scalar_select %p146, %s17, 1
        %s148 = smul.addr %s147, 2
        %s149 = smul.addr %s148, 4
        %s150 = scalar_lea.vmem %s0, %s149
        %p151 = pneg %p38
        %p152 = pneg %p35
        %p153 = pneg %p59
        %p154 = pneg %p56
        %p155 = pneg %p80
        %p156 = pneg %p77
        %p157 = pneg %p106
        %p158 = pneg %p103
        %s159 = sand.u32 %s93, 1
        %s160 = scalar_lea.sflag [#allocation3], %s159
        %s161 = sand.u32 %s93, 1
        %s162 = smul.addr %s161, 8
        %s163 = scalar_lea.vmem [#allocation2], %s162
        %p164 = scmp.lt.s32.totalorder %s17, 1
        %s165 = scalar_select %p164, %s17, 1
        %s166 = smul.addr %s165, 2
        %s167 = smul.addr %s166, 4
        %s168 = scalar_lea.vmem %s0, %s167
        %v169 = vld [vmem:[%s168] sm:$0xff]
        %v170 = vlaneseq
        %v171 = vand.u32 %v170, 127
        %v172 = vadd.s32 %v171, 128
        %vm173 = vcmp.lt.s32.totalorder %v171, 0
        %v174 = vsub.s32 0, %v171
        %v175 = vsel %vm173, %v174, %v171
        %v176 = vshrl.u32 %v175, 4
        %v177 = vand.u32 %v175, 15
        %v178 = vsub.s32 0, %v177
        %v179 = vsel %vm173, %v178, %v177
        %vm180 = vcmp.lt.s32.totalorder %v172, 0
        %v181 = vsub.s32 0, %v172
        %v182 = vsel %vm180, %v181, %v172
        %v183 = vshrl.u32 %v182, 4
        %v184 = vand.u32 %v182, 15
        %v185 = vsub.s32 0, %v184
        %v186 = vsel %vm180, %v185, %v184
        %vm187 = vcmp.ne.s32.totalorder %v179, 0
        %vm188 = vcmp.ne.s32.totalorder %v186, 0
        %vm189 = vcmp.lt.s32.totalorder %v179, 0
        %vm190 = vcmp.lt.s32.totalorder %v186, 0
        %vm191 = vmand %vm189, %vm187
        %vm192 = vmand %vm190, %vm188
        %v193 = vadd.s32 %v179, 16
        %v194 = vadd.s32 %v186, 16
        %v195 = vsel %vm191, %v193, %v179
        %v196 = vsel %vm192, %v194, %v186
        %vm197 = vcmp.eq.s32.totalorder %v195, 0
        %vm198 = vcmp.eq.s32.totalorder %v196, 0
        %vm199 = vcmp.eq.s32.totalorder %v195, 15
        %vm200 = vcmp.eq.s32.totalorder %v196, 15
        %vm201 = vcmp.lt.s32.totalorder %v171, 16
        %vm202 = vcmp.lt.s32.totalorder %v172, 16
        %vm203 = vcmp.ge.s32.totalorder %v171, 240
        %vm204 = vcmp.ge.s32.totalorder %v172, 240
        %v205 = vld [vmem:[%s1] sm:$0xf]
        %v206 = vld [vmem:[%s1 + $0x4] sm:$0xf]
        %v207 = vld [vmem:[%s1 + $0x8] sm:$0xf]
        %v208 = vld [vmem:[%s1 + $0xc] sm:$0xf]
        %v209 = vld [vmem:[%s1 + $0x10] sm:$0xf]
        %v210 = vld [vmem:[%s1 + $0x14] sm:$0xf]
        %v211 = vld [vmem:[%s1 + $0x18] sm:$0xf]
        %v212 = vld [vmem:[%s1 + $0x1c] sm:$0xf]
        %v213 = vld [vmem:[%s1 + $0x20] sm:$0xf]
        %v214 = vld [vmem:[%s2] sm:$0xf]
        %v215 = vld [vmem:[%s2 + $0x4] sm:$0xf]
        %v216 = vld [vmem:[%s2 + $0x8] sm:$0xf]
        %v217 = vld [vmem:[%s2 + $0xc] sm:$0xf]
        %v218 = vld [vmem:[%s2 + $0x10] sm:$0xf]
        %v219 = vld [vmem:[%s2 + $0x14] sm:$0xf]
        %v220 = vld [vmem:[%s2 + $0x18] sm:$0xf]
        %v221 = vld [vmem:[%s2 + $0x1c] sm:$0xf]
        %v222 = vld [vmem:[%s2 + $0x20] sm:$0xf]
        %v224 = vcombine.high %v169, %v169
        %226 = vrot.lane.b32.xlu0 %v169, 16
        %v227 = vpop.permute.xlu0 %226
        %228 = vrot.lane.b32.xlu0 %v224, 16
        %v229 = vpop.permute.xlu0 %228
        %v230 = vsel %vm201, %v227, %v229
        %v231 = vsel %vm201, %v229, %v227
        %232 = vrot.lane.b32.xlu0 %v169, 112
        %v233 = vpop.permute.xlu0 %232
        %234 = vrot.lane.b32.xlu0 %v224, 112
        %v235 = vpop.permute.xlu0 %234
        %vm236 = vcmp.lt.s32.totalorder %v171, 112
        %v237 = vsel %vm236, %v233, %v235
        %v238 = vsel %vm236, %v235, %v233
        %v239 = vsel %vm201, 1, 0
        %v240 = vsel %vm202, 1, 0
        %vm241 = vcmp.eq.s32.totalorder %v239, 1
        %vm242 = vcmp.eq.s32.totalorder %v240, 1
        %v243 = vsel %vm241, %v237, %v231
        %v244 = vsel %vm242, %v238, %v230
        %v245 = vsel %vm203, 1, 0
        %v246 = vsel %vm204, 1, 0
        %vm247 = vcmp.eq.s32.totalorder %v245, 1
        %vm248 = vcmp.eq.s32.totalorder %v246, 1
        %v249 = vsel %vm247, %v231, %v237
        %v250 = vsel %vm248, %v230, %v238
        %251 = vrot.lane.b32.xlu0 %v243, 1
        %v252 = vpop.permute.xlu0 %251
        %253 = vrot.lane.b32.xlu0 %v244, 1
        %v254 = vpop.permute.xlu0 %253
        %vm255 = vcmp.lt.s32.totalorder %v171, 1
        %v256 = vsel %vm255, %v252, %v254
        %v257 = vsel %vm255, %v254, %v252
        %258 = vrot.lane.b32.xlu0 %v243, 127
        %v259 = vpop.permute.xlu0 %258
        %260 = vrot.lane.b32.xlu0 %v244, 127
        %v261 = vpop.permute.xlu0 %260
        %vm262 = vcmp.lt.s32.totalorder %v171, 127
        %v263 = vsel %vm262, %v259, %v261
        %v264 = vsel %vm262, %v261, %v259
        %v265 = vsel %vm197, 1, 0
        %v266 = vsel %vm198, 1, 0
        %vm267 = vcmp.eq.s32.totalorder %v265, 1
        %vm268 = vcmp.eq.s32.totalorder %v266, 1
        %v269 = vsel %vm267, %v263, %v257
        %v270 = vsel %vm268, %v264, %v256
        %v271 = vsel %vm199, 1, 0
        %v272 = vsel %vm200, 1, 0
        %vm273 = vcmp.eq.s32.totalorder %v271, 1
        %vm274 = vcmp.eq.s32.totalorder %v272, 1
        %v275 = vsel %vm273, %v257, %v263
        %v276 = vsel %vm274, %v256, %v264
        %277 = vrot.lane.b32.xlu0 %v169, 1
        %v278 = vpop.permute.xlu0 %277
        %279 = vrot.lane.b32.xlu0 %v224, 1
        %v280 = vpop.permute.xlu0 %279
        %v281 = vsel %vm255, %v278, %v280
        %v282 = vsel %vm255, %v280, %v278
        %283 = vrot.lane.b32.xlu0 %v169, 127
        %v284 = vpop.permute.xlu0 %283
        %285 = vrot.lane.b32.xlu0 %v224, 127
        %v286 = vpop.permute.xlu0 %285
        %v287 = vsel %vm262, %v284, %v286
        %v288 = vsel %vm262, %v286, %v284
        %v289 = vsel %vm267, %v287, %v282
        %v290 = vsel %vm268, %v288, %v281
        %v291 = vsel %vm273, %v282, %v287
        %v292 = vsel %vm274, %v281, %v288
        %293 = vrot.lane.b32.xlu0 %v249, 1
        %v294 = vpop.permute.xlu0 %293
        %295 = vrot.lane.b32.xlu0 %v250, 1
        %v296 = vpop.permute.xlu0 %295
        %v297 = vsel %vm255, %v294, %v296
        %v298 = vsel %vm255, %v296, %v294
        %299 = vrot.lane.b32.xlu0 %v249, 127
        %v300 = vpop.permute.xlu0 %299
        %301 = vrot.lane.b32.xlu0 %v250, 127
        %v302 = vpop.permute.xlu0 %301
        %v303 = vsel %vm262, %v300, %v302
        %v304 = vsel %vm262, %v302, %v300
        %v305 = vsel %vm267, %v303, %v298
        %v306 = vsel %vm268, %v304, %v297
        %v307 = vsel %vm273, %v298, %v303
        %v308 = vsel %vm274, %v297, %v304
        %vm309 = vcmask 31744
        %v311 = vsel %vm309, %v206, 0
        %vm313 = vcmask 1043456
        %v315 = vsel %vm313, %v243, 0
        %v318 = vsel %vm313, %v244, 0
        %320 = vmatprep.subr.mxu0 0.0
        %321 = vmatpush1.msra.mxu0 0.0
        %322 = vmatprep.subr.mxu0 0.0
        %323 = vmatpush1.msra.mxu0 0.0
        %324 = vmatprep.subr.mxu0 0.0
        %325 = vmatpush1.msra.mxu0 0.0
        %326 = vmatprep.subr.mxu0 0.0
        %327 = vmatpush1.msra.mxu0 0.0
        %328 = vmatprep.subr.mxu0 0.0
        %329 = vmatpush1.msra.mxu0 0.0
        %330 = vmatprep.subr.mxu0 0.0
        %331 = vmatpush1.msra.mxu0 0.0
        %332 = vmatprep.subr.mxu0 0.0
        %333 = vmatpush1.msra.mxu0 0.0
        %334 = vmatprep.subr.mxu0 0.0
        %335 = vmatpush1.msra.mxu0 0.0
        %336 = vmatprep.subr.mxu0 0.0
        %337 = vmatpush1.msra.mxu0 0.0
        %338 = vmatprep.subr.mxu0 0.0
        %339 = vmatpush1.msra.mxu0 0.0
        %340 = vmatprep.subr.mxu0 0.0
        %341 = vmatpush1.msra.mxu0 0.0
        %342 = vmatprep.subr.mxu0 0.0
        %343 = vmatpush1.msra.mxu0 0.0
        %344 = vmatprep.subr.mxu0 0.0
        %345 = vmatpush1.msra.mxu0 0.0
        %346 = vmatprep.subr.mxu0 0.0
        %347 = vmatpush1.msra.mxu0 0.0
        %348 = vmatprep.subr.mxu0 0.0
        %349 = vmatpush1.msra.mxu0 0.0
        %350 = vmatprep.subr.mxu0 %v318
        %351 = vmatpush1.msra.mxu0 %v315
        %352 = vmatprep.subr.mxu0 0.0
        %353 = vmatpush2.msra.mxu0 0.0
        %354 = vmatprep.subr.mxu0 0.0
        %355 = vmatpush2.msra.mxu0 0.0
        %356 = vmatprep.subr.mxu0 0.0
        %357 = vmatpush2.msra.mxu0 0.0
        %358 = vmatprep.subr.mxu0 0.0
        %359 = vmatpush2.msra.mxu0 0.0
        %360 = vmatprep.subr.mxu0 0.0
        %361 = vmatpush2.msra.mxu0 0.0
        %362 = vmatprep.subr.mxu0 0.0
        %363 = vmatpush2.msra.mxu0 0.0
        %364 = vmatprep.subr.mxu0 0.0
        %365 = vmatpush2.msra.mxu0 0.0
        %366 = vmatprep.subr.mxu0 0.0
        %367 = vmatpush2.msra.mxu0 0.0
        %368 = vmatprep.subr.mxu0 0.0
        %369 = vmatpush2.msra.mxu0 0.0
        %370 = vmatprep.subr.mxu0 0.0
        %371 = vmatpush2.msra.mxu0 0.0
        %372 = vmatprep.subr.mxu0 0.0
        %373 = vmatpush2.msra.mxu0 0.0
        %374 = vmatprep.subr.mxu0 0.0
        %375 = vmatpush2.msra.mxu0 0.0
        %376 = vmatprep.subr.mxu0 0.0
        %377 = vmatpush2.msra.mxu0 0.0
        %378 = vmatprep.subr.mxu0 0.0
        %379 = vmatpush2.msra.mxu0 0.0
        %380 = vmatprep.subr.mxu0 0.0
        %381 = vmatpush2.msra.mxu0 0.0
        %382 = vmatprep.subr.mxu0 0.0
        %383 = vmatpush2.msra.mxu0 0.0
        %384 = vmatprep.mubr.f32.mxu0 0.0
        %385 = vmatmul.mubr.f32.gmra.mxu0 %v311
        %v386 = vpop.f32.mrf.mxu0
        %v387 = vadd.f32 0.0, %v386
        %v388 = vpop.f32.mrf.mxu0
        %v389 = vadd.f32 0.0, %v388
        %390 = vdwg.mxu0
        %v392 = vsel %vm309, %v205, 0
        %v395 = vsel %vm313, %v269, 0
        %v398 = vsel %vm313, %v270, 0
        %400 = vmatprep.subr.mxu0 0.0
        %401 = vmatpush1.msra.mxu0 0.0
        %402 = vmatprep.subr.mxu0 0.0
        %403 = vmatpush1.msra.mxu0 0.0
        %404 = vmatprep.subr.mxu0 0.0
        %405 = vmatpush1.msra.mxu0 0.0
        %406 = vmatprep.subr.mxu0 0.0
        %407 = vmatpush1.msra.mxu0 0.0
        %408 = vmatprep.subr.mxu0 0.0
        %409 = vmatpush1.msra.mxu0 0.0
        %410 = vmatprep.subr.mxu0 0.0
        %411 = vmatpush1.msra.mxu0 0.0
        %412 = vmatprep.subr.mxu0 0.0
        %413 = vmatpush1.msra.mxu0 0.0
        %414 = vmatprep.subr.mxu0 0.0
        %415 = vmatpush1.msra.mxu0 0.0
        %416 = vmatprep.subr.mxu0 0.0
        %417 = vmatpush1.msra.mxu0 0.0
        %418 = vmatprep.subr.mxu0 0.0
        %419 = vmatpush1.msra.mxu0 0.0
        %420 = vmatprep.subr.mxu0 0.0
        %421 = vmatpush1.msra.mxu0 0.0
        %422 = vmatprep.subr.mxu0 0.0
        %423 = vmatpush1.msra.mxu0 0.0
        %424 = vmatprep.subr.mxu0 0.0
        %425 = vmatpush1.msra.mxu0 0.0
        %426 = vmatprep.subr.mxu0 0.0
        %427 = vmatpush1.msra.mxu0 0.0
        %428 = vmatprep.subr.mxu0 0.0
        %429 = vmatpush1.msra.mxu0 0.0
        %430 = vmatprep.subr.mxu0 %v398
        %431 = vmatpush1.msra.mxu0 %v395
        %432 = vmatprep.subr.mxu0 0.0
        %433 = vmatpush2.msra.mxu0 0.0
        %434 = vmatprep.subr.mxu0 0.0
        %435 = vmatpush2.msra.mxu0 0.0
        %436 = vmatprep.subr.mxu0 0.0
        %437 = vmatpush2.msra.mxu0 0.0
        %438 = vmatprep.subr.mxu0 0.0
        %439 = vmatpush2.msra.mxu0 0.0
        %440 = vmatprep.subr.mxu0 0.0
        %441 = vmatpush2.msra.mxu0 0.0
        %442 = vmatprep.subr.mxu0 0.0
        %443 = vmatpush2.msra.mxu0 0.0
        %444 = vmatprep.subr.mxu0 0.0
        %445 = vmatpush2.msra.mxu0 0.0
        %446 = vmatprep.subr.mxu0 0.0
        %447 = vmatpush2.msra.mxu0 0.0
        %448 = vmatprep.subr.mxu0 0.0
        %449 = vmatpush2.msra.mxu0 0.0
        %450 = vmatprep.subr.mxu0 0.0
        %451 = vmatpush2.msra.mxu0 0.0
        %452 = vmatprep.subr.mxu0 0.0
        %453 = vmatpush2.msra.mxu0 0.0
        %454 = vmatprep.subr.mxu0 0.0
        %455 = vmatpush2.msra.mxu0 0.0
        %456 = vmatprep.subr.mxu0 0.0
        %457 = vmatpush2.msra.mxu0 0.0
        %458 = vmatprep.subr.mxu0 0.0
        %459 = vmatpush2.msra.mxu0 0.0
        %460 = vmatprep.subr.mxu0 0.0
        %461 = vmatpush2.msra.mxu0 0.0
        %462 = vmatprep.subr.mxu0 0.0
        %463 = vmatpush2.msra.mxu0 0.0
        %464 = vmatprep.mubr.f32.mxu0 0.0
        %465 = vmatmul.mubr.f32.gmra.mxu0 %v392
        %v466 = vpop.f32.mrf.mxu0
        %v467 = vadd.f32 %v387, %v466
        %v468 = vpop.f32.mrf.mxu0
        %v469 = vadd.f32 %v389, %v468
        %470 = vdwg.mxu0
        %v472 = vsel %vm309, %v207, 0
        %v475 = vsel %vm313, %v275, 0
        %v478 = vsel %vm313, %v276, 0
        %480 = vmatprep.subr.mxu0 0.0
        %481 = vmatpush1.msra.mxu0 0.0
        %482 = vmatprep.subr.mxu0 0.0
        %483 = vmatpush1.msra.mxu0 0.0
        %484 = vmatprep.subr.mxu0 0.0
        %485 = vmatpush1.msra.mxu0 0.0
        %486 = vmatprep.subr.mxu0 0.0
        %487 = vmatpush1.msra.mxu0 0.0
        %488 = vmatprep.subr.mxu0 0.0
        %489 = vmatpush1.msra.mxu0 0.0
        %490 = vmatprep.subr.mxu0 0.0
        %491 = vmatpush1.msra.mxu0 0.0
        %492 = vmatprep.subr.mxu0 0.0
        %493 = vmatpush1.msra.mxu0 0.0
        %494 = vmatprep.subr.mxu0 0.0
        %495 = vmatpush1.msra.mxu0 0.0
        %496 = vmatprep.subr.mxu0 0.0
        %497 = vmatpush1.msra.mxu0 0.0
        %498 = vmatprep.subr.mxu0 0.0
        %499 = vmatpush1.msra.mxu0 0.0
        %500 = vmatprep.subr.mxu0 0.0
        %501 = vmatpush1.msra.mxu0 0.0
        %502 = vmatprep.subr.mxu0 0.0
        %503 = vmatpush1.msra.mxu0 0.0
        %504 = vmatprep.subr.mxu0 0.0
        %505 = vmatpush1.msra.mxu0 0.0
        %506 = vmatprep.subr.mxu0 0.0
        %507 = vmatpush1.msra.mxu0 0.0
        %508 = vmatprep.subr.mxu0 0.0
        %509 = vmatpush1.msra.mxu0 0.0
        %510 = vmatprep.subr.mxu0 %v478
        %511 = vmatpush1.msra.mxu0 %v475
        %512 = vmatprep.subr.mxu0 0.0
        %513 = vmatpush2.msra.mxu0 0.0
        %514 = vmatprep.subr.mxu0 0.0
        %515 = vmatpush2.msra.mxu0 0.0
        %516 = vmatprep.subr.mxu0 0.0
        %517 = vmatpush2.msra.mxu0 0.0
        %518 = vmatprep.subr.mxu0 0.0
        %519 = vmatpush2.msra.mxu0 0.0
        %520 = vmatprep.subr.mxu0 0.0
        %521 = vmatpush2.msra.mxu0 0.0
        %522 = vmatprep.subr.mxu0 0.0
        %523 = vmatpush2.msra.mxu0 0.0
        %524 = vmatprep.subr.mxu0 0.0
        %525 = vmatpush2.msra.mxu0 0.0
        %526 = vmatprep.subr.mxu0 0.0
        %527 = vmatpush2.msra.mxu0 0.0
        %528 = vmatprep.subr.mxu0 0.0
        %529 = vmatpush2.msra.mxu0 0.0
        %530 = vmatprep.subr.mxu0 0.0
        %531 = vmatpush2.msra.mxu0 0.0
        %532 = vmatprep.subr.mxu0 0.0
        %533 = vmatpush2.msra.mxu0 0.0
        %534 = vmatprep.subr.mxu0 0.0
        %535 = vmatpush2.msra.mxu0 0.0
        %536 = vmatprep.subr.mxu0 0.0
        %537 = vmatpush2.msra.mxu0 0.0
        %538 = vmatprep.subr.mxu0 0.0
        %539 = vmatpush2.msra.mxu0 0.0
        %540 = vmatprep.subr.mxu0 0.0
        %541 = vmatpush2.msra.mxu0 0.0
        %542 = vmatprep.subr.mxu0 0.0
        %543 = vmatpush2.msra.mxu0 0.0
        %544 = vmatprep.mubr.f32.mxu0 0.0
        %545 = vmatmul.mubr.f32.gmra.mxu0 %v472
        %v546 = vpop.f32.mrf.mxu0
        %v547 = vadd.f32 0.0, %v546
        %v548 = vpop.f32.mrf.mxu0
        %v549 = vadd.f32 0.0, %v548
        %550 = vdwg.mxu0
        %v551 = vadd.f32 %v467, %v547
        %v552 = vadd.f32 %v469, %v549
        %v554 = vsel %vm309, %v208, 0
        %v557 = vsel %vm313, %v289, 0
        %v560 = vsel %vm313, %v290, 0
        %562 = vmatprep.subr.mxu0 0.0
        %563 = vmatpush1.msra.mxu0 0.0
        %564 = vmatprep.subr.mxu0 0.0
        %565 = vmatpush1.msra.mxu0 0.0
        %566 = vmatprep.subr.mxu0 0.0
        %567 = vmatpush1.msra.mxu0 0.0
        %568 = vmatprep.subr.mxu0 0.0
        %569 = vmatpush1.msra.mxu0 0.0
        %570 = vmatprep.subr.mxu0 0.0
        %571 = vmatpush1.msra.mxu0 0.0
        %572 = vmatprep.subr.mxu0 0.0
        %573 = vmatpush1.msra.mxu0 0.0
        %574 = vmatprep.subr.mxu0 0.0
        %575 = vmatpush1.msra.mxu0 0.0
        %576 = vmatprep.subr.mxu0 0.0
        %577 = vmatpush1.msra.mxu0 0.0
        %578 = vmatprep.subr.mxu0 0.0
        %579 = vmatpush1.msra.mxu0 0.0
        %580 = vmatprep.subr.mxu0 0.0
        %581 = vmatpush1.msra.mxu0 0.0
        %582 = vmatprep.subr.mxu0 0.0
        %583 = vmatpush1.msra.mxu0 0.0
        %584 = vmatprep.subr.mxu0 0.0
        %585 = vmatpush1.msra.mxu0 0.0
        %586 = vmatprep.subr.mxu0 0.0
        %587 = vmatpush1.msra.mxu0 0.0
        %588 = vmatprep.subr.mxu0 0.0
        %589 = vmatpush1.msra.mxu0 0.0
        %590 = vmatprep.subr.mxu0 0.0
        %591 = vmatpush1.msra.mxu0 0.0
        %592 = vmatprep.subr.mxu0 %v560
        %593 = vmatpush1.msra.mxu0 %v557
        %594 = vmatprep.subr.mxu0 0.0
        %595 = vmatpush2.msra.mxu0 0.0
        %596 = vmatprep.subr.mxu0 0.0
        %597 = vmatpush2.msra.mxu0 0.0
        %598 = vmatprep.subr.mxu0 0.0
        %599 = vmatpush2.msra.mxu0 0.0
        %600 = vmatprep.subr.mxu0 0.0
        %601 = vmatpush2.msra.mxu0 0.0
        %602 = vmatprep.subr.mxu0 0.0
        %603 = vmatpush2.msra.mxu0 0.0
        %604 = vmatprep.subr.mxu0 0.0
        %605 = vmatpush2.msra.mxu0 0.0
        %606 = vmatprep.subr.mxu0 0.0
        %607 = vmatpush2.msra.mxu0 0.0
        %608 = vmatprep.subr.mxu0 0.0
        %609 = vmatpush2.msra.mxu0 0.0
        %610 = vmatprep.subr.mxu0 0.0
        %611 = vmatpush2.msra.mxu0 0.0
        %612 = vmatprep.subr.mxu0 0.0
        %613 = vmatpush2.msra.mxu0 0.0
        %614 = vmatprep.subr.mxu0 0.0
        %615 = vmatpush2.msra.mxu0 0.0
        %616 = vmatprep.subr.mxu0 0.0
        %617 = vmatpush2.msra.mxu0 0.0
        %618 = vmatprep.subr.mxu0 0.0
        %619 = vmatpush2.msra.mxu0 0.0
        %620 = vmatprep.subr.mxu0 0.0
        %621 = vmatpush2.msra.mxu0 0.0
        %622 = vmatprep.subr.mxu0 0.0
        %623 = vmatpush2.msra.mxu0 0.0
        %624 = vmatprep.subr.mxu0 0.0
        %625 = vmatpush2.msra.mxu0 0.0
        %626 = vmatprep.mubr.f32.mxu0 0.0
        %627 = vmatmul.mubr.f32.gmra.mxu0 %v554
        %v628 = vpop.f32.mrf.mxu0
        %v629 = vadd.f32 0.0, %v628
        %v630 = vpop.f32.mrf.mxu0
        %v631 = vadd.f32 0.0, %v630
        %632 = vdwg.mxu0
        %v633 = vadd.f32 %v551, %v629
        %v634 = vadd.f32 %v552, %v631
        %v636 = vsel %vm309, %v209, 0
        %v638 = vsel %vm313, %v169, 0
        %v640 = vsel %vm313, %v224, 0
        %642 = vmatprep.subr.mxu0 0.0
        %643 = vmatpush1.msra.mxu0 0.0
        %644 = vmatprep.subr.mxu0 0.0
        %645 = vmatpush1.msra.mxu0 0.0
        %646 = vmatprep.subr.mxu0 0.0
        %647 = vmatpush1.msra.mxu0 0.0
        %648 = vmatprep.subr.mxu0 0.0
        %649 = vmatpush1.msra.mxu0 0.0
        %650 = vmatprep.subr.mxu0 0.0
        %651 = vmatpush1.msra.mxu0 0.0
        %652 = vmatprep.subr.mxu0 0.0
        %653 = vmatpush1.msra.mxu0 0.0
        %654 = vmatprep.subr.mxu0 0.0
        %655 = vmatpush1.msra.mxu0 0.0
        %656 = vmatprep.subr.mxu0 0.0
        %657 = vmatpush1.msra.mxu0 0.0
        %658 = vmatprep.subr.mxu0 0.0
        %659 = vmatpush1.msra.mxu0 0.0
        %660 = vmatprep.subr.mxu0 0.0
        %661 = vmatpush1.msra.mxu0 0.0
        %662 = vmatprep.subr.mxu0 0.0
        %663 = vmatpush1.msra.mxu0 0.0
        %664 = vmatprep.subr.mxu0 0.0
        %665 = vmatpush1.msra.mxu0 0.0
        %666 = vmatprep.subr.mxu0 0.0
        %667 = vmatpush1.msra.mxu0 0.0
        %668 = vmatprep.subr.mxu0 0.0
        %669 = vmatpush1.msra.mxu0 0.0
        %670 = vmatprep.subr.mxu0 0.0
        %671 = vmatpush1.msra.mxu0 0.0
        %672 = vmatprep.subr.mxu0 %v640
        %673 = vmatpush1.msra.mxu0 %v638
        %674 = vmatprep.subr.mxu0 0.0
        %675 = vmatpush2.msra.mxu0 0.0
        %676 = vmatprep.subr.mxu0 0.0
        %677 = vmatpush2.msra.mxu0 0.0
        %678 = vmatprep.subr.mxu0 0.0
        %679 = vmatpush2.msra.mxu0 0.0
        %680 = vmatprep.subr.mxu0 0.0
        %681 = vmatpush2.msra.mxu0 0.0
        %682 = vmatprep.subr.mxu0 0.0
        %683 = vmatpush2.msra.mxu0 0.0
        %684 = vmatprep.subr.mxu0 0.0
        %685 = vmatpush2.msra.mxu0 0.0
        %686 = vmatprep.subr.mxu0 0.0
        %687 = vmatpush2.msra.mxu0 0.0
        %688 = vmatprep.subr.mxu0 0.0
        %689 = vmatpush2.msra.mxu0 0.0
        %690 = vmatprep.subr.mxu0 0.0
        %691 = vmatpush2.msra.mxu0 0.0
        %692 = vmatprep.subr.mxu0 0.0
        %693 = vmatpush2.msra.mxu0 0.0
        %694 = vmatprep.subr.mxu0 0.0
        %695 = vmatpush2.msra.mxu0 0.0
        %696 = vmatprep.subr.mxu0 0.0
        %697 = vmatpush2.msra.mxu0 0.0
        %698 = vmatprep.subr.mxu0 0.0
        %699 = vmatpush2.msra.mxu0 0.0
        %700 = vmatprep.subr.mxu0 0.0
        %701 = vmatpush2.msra.mxu0 0.0
        %702 = vmatprep.subr.mxu0 0.0
        %703 = vmatpush2.msra.mxu0 0.0
        %704 = vmatprep.subr.mxu0 0.0
        %705 = vmatpush2.msra.mxu0 0.0
        %706 = vmatprep.mubr.f32.mxu0 0.0
        %707 = vmatmul.mubr.f32.gmra.mxu0 %v636
        %v708 = vpop.f32.mrf.mxu0
        %v709 = vadd.f32 0.0, %v708
        %v710 = vpop.f32.mrf.mxu0
        %v711 = vadd.f32 0.0, %v710
        %712 = vdwg.mxu0
        %v713 = vadd.f32 %v633, %v709
        %v714 = vadd.f32 %v634, %v711
        %v716 = vsel %vm309, %v210, 0
        %v719 = vsel %vm313, %v291, 0
        %v722 = vsel %vm313, %v292, 0
        %724 = vmatprep.subr.mxu0 0.0
        %725 = vmatpush1.msra.mxu0 0.0
        %726 = vmatprep.subr.mxu0 0.0
        %727 = vmatpush1.msra.mxu0 0.0
        %728 = vmatprep.subr.mxu0 0.0
        %729 = vmatpush1.msra.mxu0 0.0
        %730 = vmatprep.subr.mxu0 0.0
        %731 = vmatpush1.msra.mxu0 0.0
        %732 = vmatprep.subr.mxu0 0.0
        %733 = vmatpush1.msra.mxu0 0.0
        %734 = vmatprep.subr.mxu0 0.0
        %735 = vmatpush1.msra.mxu0 0.0
        %736 = vmatprep.subr.mxu0 0.0
        %737 = vmatpush1.msra.mxu0 0.0
        %738 = vmatprep.subr.mxu0 0.0
        %739 = vmatpush1.msra.mxu0 0.0
        %740 = vmatprep.subr.mxu0 0.0
        %741 = vmatpush1.msra.mxu0 0.0
        %742 = vmatprep.subr.mxu0 0.0
        %743 = vmatpush1.msra.mxu0 0.0
        %744 = vmatprep.subr.mxu0 0.0
        %745 = vmatpush1.msra.mxu0 0.0
        %746 = vmatprep.subr.mxu0 0.0
        %747 = vmatpush1.msra.mxu0 0.0
        %748 = vmatprep.subr.mxu0 0.0
        %749 = vmatpush1.msra.mxu0 0.0
        %750 = vmatprep.subr.mxu0 0.0
        %751 = vmatpush1.msra.mxu0 0.0
        %752 = vmatprep.subr.mxu0 0.0
        %753 = vmatpush1.msra.mxu0 0.0
        %754 = vmatprep.subr.mxu0 %v722
        %755 = vmatpush1.msra.mxu0 %v719
        %756 = vmatprep.subr.mxu0 0.0
        %757 = vmatpush2.msra.mxu0 0.0
        %758 = vmatprep.subr.mxu0 0.0
        %759 = vmatpush2.msra.mxu0 0.0
        %760 = vmatprep.subr.mxu0 0.0
        %761 = vmatpush2.msra.mxu0 0.0
        %762 = vmatprep.subr.mxu0 0.0
        %763 = vmatpush2.msra.mxu0 0.0
        %764 = vmatprep.subr.mxu0 0.0
        %765 = vmatpush2.msra.mxu0 0.0
        %766 = vmatprep.subr.mxu0 0.0
        %767 = vmatpush2.msra.mxu0 0.0
        %768 = vmatprep.subr.mxu0 0.0
        %769 = vmatpush2.msra.mxu0 0.0
        %770 = vmatprep.subr.mxu0 0.0
        %771 = vmatpush2.msra.mxu0 0.0
        %772 = vmatprep.subr.mxu0 0.0
        %773 = vmatpush2.msra.mxu0 0.0
        %774 = vmatprep.subr.mxu0 0.0
        %775 = vmatpush2.msra.mxu0 0.0
        %776 = vmatprep.subr.mxu0 0.0
        %777 = vmatpush2.msra.mxu0 0.0
        %778 = vmatprep.subr.mxu0 0.0
        %779 = vmatpush2.msra.mxu0 0.0
        %780 = vmatprep.subr.mxu0 0.0
        %781 = vmatpush2.msra.mxu0 0.0
        %782 = vmatprep.subr.mxu0 0.0
        %783 = vmatpush2.msra.mxu0 0.0
        %784 = vmatprep.subr.mxu0 0.0
        %785 = vmatpush2.msra.mxu0 0.0
        %786 = vmatprep.subr.mxu0 0.0
        %787 = vmatpush2.msra.mxu0 0.0
        %788 = vmatprep.mubr.f32.mxu0 0.0
        %789 = vmatmul.mubr.f32.gmra.mxu0 %v716
        %v790 = vpop.f32.mrf.mxu0
        %v791 = vadd.f32 0.0, %v790
        %v792 = vpop.f32.mrf.mxu0
        %v793 = vadd.f32 0.0, %v792
        %794 = vdwg.mxu0
        %v795 = vadd.f32 %v713, %v791
        %v796 = vadd.f32 %v714, %v793
        %v798 = vsel %vm309, %v211, 0
        %v801 = vsel %vm313, %v305, 0
        %v804 = vsel %vm313, %v306, 0
        %806 = vmatprep.subr.mxu0 0.0
        %807 = vmatpush1.msra.mxu0 0.0
        %808 = vmatprep.subr.mxu0 0.0
        %809 = vmatpush1.msra.mxu0 0.0
        %810 = vmatprep.subr.mxu0 0.0
        %811 = vmatpush1.msra.mxu0 0.0
        %812 = vmatprep.subr.mxu0 0.0
        %813 = vmatpush1.msra.mxu0 0.0
        %814 = vmatprep.subr.mxu0 0.0
        %815 = vmatpush1.msra.mxu0 0.0
        %816 = vmatprep.subr.mxu0 0.0
        %817 = vmatpush1.msra.mxu0 0.0
        %818 = vmatprep.subr.mxu0 0.0
        %819 = vmatpush1.msra.mxu0 0.0
        %820 = vmatprep.subr.mxu0 0.0
        %821 = vmatpush1.msra.mxu0 0.0
        %822 = vmatprep.subr.mxu0 0.0
        %823 = vmatpush1.msra.mxu0 0.0
        %824 = vmatprep.subr.mxu0 0.0
        %825 = vmatpush1.msra.mxu0 0.0
        %826 = vmatprep.subr.mxu0 0.0
        %827 = vmatpush1.msra.mxu0 0.0
        %828 = vmatprep.subr.mxu0 0.0
        %829 = vmatpush1.msra.mxu0 0.0
        %830 = vmatprep.subr.mxu0 0.0
        %831 = vmatpush1.msra.mxu0 0.0
        %832 = vmatprep.subr.mxu0 0.0
        %833 = vmatpush1.msra.mxu0 0.0
        %834 = vmatprep.subr.mxu0 0.0
        %835 = vmatpush1.msra.mxu0 0.0
        %836 = vmatprep.subr.mxu0 %v804
        %837 = vmatpush1.msra.mxu0 %v801
        %838 = vmatprep.subr.mxu0 0.0
        %839 = vmatpush2.msra.mxu0 0.0
        %840 = vmatprep.subr.mxu0 0.0
        %841 = vmatpush2.msra.mxu0 0.0
        %842 = vmatprep.subr.mxu0 0.0
        %843 = vmatpush2.msra.mxu0 0.0
        %844 = vmatprep.subr.mxu0 0.0
        %845 = vmatpush2.msra.mxu0 0.0
        %846 = vmatprep.subr.mxu0 0.0
        %847 = vmatpush2.msra.mxu0 0.0
        %848 = vmatprep.subr.mxu0 0.0
        %849 = vmatpush2.msra.mxu0 0.0
        %850 = vmatprep.subr.mxu0 0.0
        %851 = vmatpush2.msra.mxu0 0.0
        %852 = vmatprep.subr.mxu0 0.0
        %853 = vmatpush2.msra.mxu0 0.0
        %854 = vmatprep.subr.mxu0 0.0
        %855 = vmatpush2.msra.mxu0 0.0
        %856 = vmatprep.subr.mxu0 0.0
        %857 = vmatpush2.msra.mxu0 0.0
        %858 = vmatprep.subr.mxu0 0.0
        %859 = vmatpush2.msra.mxu0 0.0
        %860 = vmatprep.subr.mxu0 0.0
        %861 = vmatpush2.msra.mxu0 0.0
        %862 = vmatprep.subr.mxu0 0.0
        %863 = vmatpush2.msra.mxu0 0.0
        %864 = vmatprep.subr.mxu0 0.0
        %865 = vmatpush2.msra.mxu0 0.0
        %866 = vmatprep.subr.mxu0 0.0
        %867 = vmatpush2.msra.mxu0 0.0
        %868 = vmatprep.subr.mxu0 0.0
        %869 = vmatpush2.msra.mxu0 0.0
        %870 = vmatprep.mubr.f32.mxu0 0.0
        %871 = vmatmul.mubr.f32.gmra.mxu0 %v798
        %v872 = vpop.f32.mrf.mxu0
        %v873 = vadd.f32 0.0, %v872
        %v874 = vpop.f32.mrf.mxu0
        %v875 = vadd.f32 0.0, %v874
        %876 = vdwg.mxu0
        %v877 = vadd.f32 %v795, %v873
        %v878 = vadd.f32 %v796, %v875
        %v880 = vsel %vm309, %v212, 0
        %v883 = vsel %vm313, %v249, 0
        %v886 = vsel %vm313, %v250, 0
        %888 = vmatprep.subr.mxu0 0.0
        %889 = vmatpush1.msra.mxu0 0.0
        %890 = vmatprep.subr.mxu0 0.0
        %891 = vmatpush1.msra.mxu0 0.0
        %892 = vmatprep.subr.mxu0 0.0
        %893 = vmatpush1.msra.mxu0 0.0
        %894 = vmatprep.subr.mxu0 0.0
        %895 = vmatpush1.msra.mxu0 0.0
        %896 = vmatprep.subr.mxu0 0.0
        %897 = vmatpush1.msra.mxu0 0.0
        %898 = vmatprep.subr.mxu0 0.0
        %899 = vmatpush1.msra.mxu0 0.0
        %900 = vmatprep.subr.mxu0 0.0
        %901 = vmatpush1.msra.mxu0 0.0
        %902 = vmatprep.subr.mxu0 0.0
        %903 = vmatpush1.msra.mxu0 0.0
        %904 = vmatprep.subr.mxu0 0.0
        %905 = vmatpush1.msra.mxu0 0.0
        %906 = vmatprep.subr.mxu0 0.0
        %907 = vmatpush1.msra.mxu0 0.0
        %908 = vmatprep.subr.mxu0 0.0
        %909 = vmatpush1.msra.mxu0 0.0
        %910 = vmatprep.subr.mxu0 0.0
        %911 = vmatpush1.msra.mxu0 0.0
        %912 = vmatprep.subr.mxu0 0.0
        %913 = vmatpush1.msra.mxu0 0.0
        %914 = vmatprep.subr.mxu0 0.0
        %915 = vmatpush1.msra.mxu0 0.0
        %916 = vmatprep.subr.mxu0 0.0
        %917 = vmatpush1.msra.mxu0 0.0
        %918 = vmatprep.subr.mxu0 %v886
        %919 = vmatpush1.msra.mxu0 %v883
        %920 = vmatprep.subr.mxu0 0.0
        %921 = vmatpush2.msra.mxu0 0.0
        %922 = vmatprep.subr.mxu0 0.0
        %923 = vmatpush2.msra.mxu0 0.0
        %924 = vmatprep.subr.mxu0 0.0
        %925 = vmatpush2.msra.mxu0 0.0
        %926 = vmatprep.subr.mxu0 0.0
        %927 = vmatpush2.msra.mxu0 0.0
        %928 = vmatprep.subr.mxu0 0.0
        %929 = vmatpush2.msra.mxu0 0.0
        %930 = vmatprep.subr.mxu0 0.0
        %931 = vmatpush2.msra.mxu0 0.0
        %932 = vmatprep.subr.mxu0 0.0
        %933 = vmatpush2.msra.mxu0 0.0
        %934 = vmatprep.subr.mxu0 0.0
        %935 = vmatpush2.msra.mxu0 0.0
        %936 = vmatprep.subr.mxu0 0.0
        %937 = vmatpush2.msra.mxu0 0.0
        %938 = vmatprep.subr.mxu0 0.0
        %939 = vmatpush2.msra.mxu0 0.0
        %940 = vmatprep.subr.mxu0 0.0
        %941 = vmatpush2.msra.mxu0 0.0
        %942 = vmatprep.subr.mxu0 0.0
        %943 = vmatpush2.msra.mxu0 0.0
        %944 = vmatprep.subr.mxu0 0.0
        %945 = vmatpush2.msra.mxu0 0.0
        %946 = vmatprep.subr.mxu0 0.0
        %947 = vmatpush2.msra.mxu0 0.0
        %948 = vmatprep.subr.mxu0 0.0
        %949 = vmatpush2.msra.mxu0 0.0
        %950 = vmatprep.subr.mxu0 0.0
        %951 = vmatpush2.msra.mxu0 0.0
        %952 = vmatprep.mubr.f32.mxu0 0.0
        %953 = vmatmul.mubr.f32.gmra.mxu0 %v880
        %v954 = vpop.f32.mrf.mxu0
        %v955 = vadd.f32 0.0, %v954
        %v956 = vpop.f32.mrf.mxu0
        %v957 = vadd.f32 0.0, %v956
        %958 = vdwg.mxu0
        %v959 = vadd.f32 %v877, %v955
        %v960 = vadd.f32 %v878, %v957
        %v962 = vsel %vm309, %v213, 0
        %v965 = vsel %vm313, %v307, 0
        %v968 = vsel %vm313, %v308, 0
        %970 = vmatprep.subr.mxu0 0.0
        %971 = vmatpush1.msra.mxu0 0.0
        %972 = vmatprep.subr.mxu0 0.0
        %973 = vmatpush1.msra.mxu0 0.0
        %974 = vmatprep.subr.mxu0 0.0
        %975 = vmatpush1.msra.mxu0 0.0
        %976 = vmatprep.subr.mxu0 0.0
        %977 = vmatpush1.msra.mxu0 0.0
        %978 = vmatprep.subr.mxu0 0.0
        %979 = vmatpush1.msra.mxu0 0.0
        %980 = vmatprep.subr.mxu0 0.0
        %981 = vmatpush1.msra.mxu0 0.0
        %982 = vmatprep.subr.mxu0 0.0
        %983 = vmatpush1.msra.mxu0 0.0
        %984 = vmatprep.subr.mxu0 0.0
        %985 = vmatpush1.msra.mxu0 0.0
        %986 = vmatprep.subr.mxu0 0.0
        %987 = vmatpush1.msra.mxu0 0.0
        %988 = vmatprep.subr.mxu0 0.0
        %989 = vmatpush1.msra.mxu0 0.0
        %990 = vmatprep.subr.mxu0 0.0
        %991 = vmatpush1.msra.mxu0 0.0
        %992 = vmatprep.subr.mxu0 0.0
        %993 = vmatpush1.msra.mxu0 0.0
        %994 = vmatprep.subr.mxu0 0.0
        %995 = vmatpush1.msra.mxu0 0.0
        %996 = vmatprep.subr.mxu0 0.0
        %997 = vmatpush1.msra.mxu0 0.0
        %998 = vmatprep.subr.mxu0 0.0
        %999 = vmatpush1.msra.mxu0 0.0
        %1000 = vmatprep.subr.mxu0 %v968
        %1001 = vmatpush1.msra.mxu0 %v965
        %1002 = vmatprep.subr.mxu0 0.0
        %1003 = vmatpush2.msra.mxu0 0.0
        %1004 = vmatprep.subr.mxu0 0.0
        %1005 = vmatpush2.msra.mxu0 0.0
        %1006 = vmatprep.subr.mxu0 0.0
        %1007 = vmatpush2.msra.mxu0 0.0
        %1008 = vmatprep.subr.mxu0 0.0
        %1009 = vmatpush2.msra.mxu0 0.0
        %1010 = vmatprep.subr.mxu0 0.0
        %1011 = vmatpush2.msra.mxu0 0.0
        %1012 = vmatprep.subr.mxu0 0.0
        %1013 = vmatpush2.msra.mxu0 0.0
        %1014 = vmatprep.subr.mxu0 0.0
        %1015 = vmatpush2.msra.mxu0 0.0
        %1016 = vmatprep.subr.mxu0 0.0
        %1017 = vmatpush2.msra.mxu0 0.0
        %1018 = vmatprep.subr.mxu0 0.0
        %1019 = vmatpush2.msra.mxu0 0.0
        %1020 = vmatprep.subr.mxu0 0.0
        %1021 = vmatpush2.msra.mxu0 0.0
        %1022 = vmatprep.subr.mxu0 0.0
        %1023 = vmatpush2.msra.mxu0 0.0
        %1024 = vmatprep.subr.mxu0 0.0
        %1025 = vmatpush2.msra.mxu0 0.0
        %1026 = vmatprep.subr.mxu0 0.0
        %1027 = vmatpush2.msra.mxu0 0.0
        %1028 = vmatprep.subr.mxu0 0.0
        %1029 = vmatpush2.msra.mxu0 0.0
        %1030 = vmatprep.subr.mxu0 0.0
        %1031 = vmatpush2.msra.mxu0 0.0
        %1032 = vmatprep.subr.mxu0 0.0
        %1033 = vmatpush2.msra.mxu0 0.0
        %1034 = vmatprep.mubr.f32.mxu0 0.0
        %1035 = vmatmul.mubr.f32.gmra.mxu0 %v962
        %v1036 = vpop.f32.mrf.mxu0
        %v1037 = vadd.f32 0.0, %v1036
        %v1038 = vpop.f32.mrf.mxu0
        %v1039 = vadd.f32 0.0, %v1038
        %1040 = vdwg.mxu0
        %v1041 = vadd.f32 %v959, %v1037
        %v1042 = vadd.f32 %v960, %v1039
        %v1043 = vsel %vm313, %v1041, 0.0
        %v1044 = vsel %vm313, %v1042, 0.0
        %v1045 = vadd.f32 %v1043, %v1044
        %1046 = vadd.xlane.f32.xlu0 %v1045
        %v1047 = vpop.xlane.xlu0 %1046
        %v1048 = vmul.f32 %v1047, 0.00390625
        %v1049 = vmul.f32 %v1041, %v1041
        %v1050 = vmul.f32 %v1042, %v1042
        %v1051 = vsel %vm313, %v1049, 0.0
        %v1052 = vsel %vm313, %v1050, 0.0
        %v1053 = vadd.f32 %v1051, %v1052
        %1054 = vadd.xlane.f32.xlu0 %v1053
        %v1055 = vpop.xlane.xlu0 %1054
        %v1056 = vmul.f32 %v1055, 0.00390625
        %v1057 = vmul.f32 %v1048, %v1048
        %v1058 = vsub.f32 %v1056, %v1057
        %v1059 = vmax.f32 %v1058, 0.0
        %v1060 = vsub.f32 %v1041, %v1048
        %v1061 = vsub.f32 %v1042, %v1048
        %v1062 = vadd.f32 %v1059, 1e-05
        %v1063 = vrsqrt.pop %v1062
        %v1064 = vmul.f32 %v1060, %v1063
        %v1065 = vmul.f32 %v1061, %v1063
        %v1066 = vmax.f32 %v1064, 0.0
        %v1067 = vmax.f32 %v1065, 0.0
        %1068 = vrot.lane.b32.xlu0 %v1066, 16
        %v1069 = vpop.permute.xlu0 %1068
        %1070 = vrot.lane.b32.xlu0 %v1067, 16
        %v1071 = vpop.permute.xlu0 %1070
        %v1072 = vsel %vm201, %v1069, %v1071
        %v1073 = vsel %vm201, %v1071, %v1069
        %1074 = vrot.lane.b32.xlu0 %v1066, 112
        %v1075 = vpop.permute.xlu0 %1074
        %1076 = vrot.lane.b32.xlu0 %v1067, 112
        %v1077 = vpop.permute.xlu0 %1076
        %v1078 = vsel %vm236, %v1075, %v1077
        %v1079 = vsel %vm236, %v1077, %v1075
        %v1080 = vsel %vm241, %v1078, %v1073
        %v1081 = vsel %vm242, %v1079, %v1072
        %v1082 = vsel %vm247, %v1073, %v1078
        %v1083 = vsel %vm248, %v1072, %v1079
        %1084 = vrot.lane.b32.xlu0 %v1080, 1
        %v1085 = vpop.permute.xlu0 %1084
        %1086 = vrot.lane.b32.xlu0 %v1081, 1
        %v1087 = vpop.permute.xlu0 %1086
        %v1088 = vsel %vm255, %v1085, %v1087
        %v1089 = vsel %vm255, %v1087, %v1085
        %1090 = vrot.lane.b32.xlu0 %v1080, 127
        %v1091 = vpop.permute.xlu0 %1090
        %1092 = vrot.lane.b32.xlu0 %v1081, 127
        %v1093 = vpop.permute.xlu0 %1092
        %v1094 = vsel %vm262, %v1091, %v1093
        %v1095 = vsel %vm262, %v1093, %v1091
        %v1096 = vsel %vm267, %v1094, %v1089
        %v1097 = vsel %vm268, %v1095, %v1088
        %v1098 = vsel %vm273, %v1089, %v1094
        %v1099 = vsel %vm274, %v1088, %v1095
        %1100 = vrot.lane.b32.xlu0 %v1066, 1
        %v1101 = vpop.permute.xlu0 %1100
        %1102 = vrot.lane.b32.xlu0 %v1067, 1
        %v1103 = vpop.permute.xlu0 %1102
        %v1104 = vsel %vm255, %v1101, %v1103
        %v1105 = vsel %vm255, %v1103, %v1101
        %1106 = vrot.lane.b32.xlu0 %v1066, 127
        %v1107 = vpop.permute.xlu0 %1106
        %1108 = vrot.lane.b32.xlu0 %v1067, 127
        %v1109 = vpop.permute.xlu0 %1108
        %v1110 = vsel %vm262, %v1107, %v1109
        %v1111 = vsel %vm262, %v1109, %v1107
        %v1112 = vsel %vm267, %v1110, %v1105
        %v1113 = vsel %vm268, %v1111, %v1104
        %v1114 = vsel %vm273, %v1105, %v1110
        %v1115 = vsel %vm274, %v1104, %v1111
        %1116 = vrot.lane.b32.xlu0 %v1082, 1
        %v1117 = vpop.permute.xlu0 %1116
        %1118 = vrot.lane.b32.xlu0 %v1083, 1
        %v1119 = vpop.permute.xlu0 %1118
        %v1120 = vsel %vm255, %v1117, %v1119
        %v1121 = vsel %vm255, %v1119, %v1117
        %1122 = vrot.lane.b32.xlu0 %v1082, 127
        %v1123 = vpop.permute.xlu0 %1122
        %1124 = vrot.lane.b32.xlu0 %v1083, 127
        %v1125 = vpop.permute.xlu0 %1124
        %v1126 = vsel %vm262, %v1123, %v1125
        %v1127 = vsel %vm262, %v1125, %v1123
        %v1128 = vsel %vm267, %v1126, %v1121
        %v1129 = vsel %vm268, %v1127, %v1120
        %v1130 = vsel %vm273, %v1121, %v1126
        %v1131 = vsel %vm274, %v1120, %v1127
        %v1133 = vsel %vm309, %v215, 0
        %v1136 = vsel %vm313, %v1080, 0
        %v1139 = vsel %vm313, %v1081, 0
        %1141 = vmatprep.subr.mxu0 0.0
        %1142 = vmatpush1.msra.mxu0 0.0
        %1143 = vmatprep.subr.mxu0 0.0
        %1144 = vmatpush1.msra.mxu0 0.0
        %1145 = vmatprep.subr.mxu0 0.0
        %1146 = vmatpush1.msra.mxu0 0.0
        %1147 = vmatprep.subr.mxu0 0.0
        %1148 = vmatpush1.msra.mxu0 0.0
        %1149 = vmatprep.subr.mxu0 0.0
        %1150 = vmatpush1.msra.mxu0 0.0
        %1151 = vmatprep.subr.mxu0 0.0
        %1152 = vmatpush1.msra.mxu0 0.0
        %1153 = vmatprep.subr.mxu0 0.0
        %1154 = vmatpush1.msra.mxu0 0.0
        %1155 = vmatprep.subr.mxu0 0.0
        %1156 = vmatpush1.msra.mxu0 0.0
        %1157 = vmatprep.subr.mxu0 0.0
        %1158 = vmatpush1.msra.mxu0 0.0
        %1159 = vmatprep.subr.mxu0 0.0
        %1160 = vmatpush1.msra.mxu0 0.0
        %1161 = vmatprep.subr.mxu0 0.0
        %1162 = vmatpush1.msra.mxu0 0.0
        %1163 = vmatprep.subr.mxu0 0.0
        %1164 = vmatpush1.msra.mxu0 0.0
        %1165 = vmatprep.subr.mxu0 0.0
        %1166 = vmatpush1.msra.mxu0 0.0
        %1167 = vmatprep.subr.mxu0 0.0
        %1168 = vmatpush1.msra.mxu0 0.0
        %1169 = vmatprep.subr.mxu0 0.0
        %1170 = vmatpush1.msra.mxu0 0.0
        %1171 = vmatprep.subr.mxu0 %v1139
        %1172 = vmatpush1.msra.mxu0 %v1136
        %1173 = vmatprep.subr.mxu0 0.0
        %1174 = vmatpush2.msra.mxu0 0.0
        %1175 = vmatprep.subr.mxu0 0.0
        %1176 = vmatpush2.msra.mxu0 0.0
        %1177 = vmatprep.subr.mxu0 0.0
        %1178 = vmatpush2.msra.mxu0 0.0
        %1179 = vmatprep.subr.mxu0 0.0
        %1180 = vmatpush2.msra.mxu0 0.0
        %1181 = vmatprep.subr.mxu0 0.0
        %1182 = vmatpush2.msra.mxu0 0.0
        %1183 = vmatprep.subr.mxu0 0.0
        %1184 = vmatpush2.msra.mxu0 0.0
        %1185 = vmatprep.subr.mxu0 0.0
        %1186 = vmatpush2.msra.mxu0 0.0
        %1187 = vmatprep.subr.mxu0 0.0
        %1188 = vmatpush2.msra.mxu0 0.0
        %1189 = vmatprep.subr.mxu0 0.0
        %1190 = vmatpush2.msra.mxu0 0.0
        %1191 = vmatprep.subr.mxu0 0.0
        %1192 = vmatpush2.msra.mxu0 0.0
        %1193 = vmatprep.subr.mxu0 0.0
        %1194 = vmatpush2.msra.mxu0 0.0
        %1195 = vmatprep.subr.mxu0 0.0
        %1196 = vmatpush2.msra.mxu0 0.0
        %1197 = vmatprep.subr.mxu0 0.0
        %1198 = vmatpush2.msra.mxu0 0.0
        %1199 = vmatprep.subr.mxu0 0.0
        %1200 = vmatpush2.msra.mxu0 0.0
        %1201 = vmatprep.subr.mxu0 0.0
        %1202 = vmatpush2.msra.mxu0 0.0
        %1203 = vmatprep.subr.mxu0 0.0
        %1204 = vmatpush2.msra.mxu0 0.0
        %1205 = vmatprep.mubr.f32.mxu0 0.0
        %1206 = vmatmul.mubr.f32.gmra.mxu0 %v1133
        %v1207 = vpop.f32.mrf.mxu0
        %v1208 = vadd.f32 0.0, %v1207
        %v1209 = vpop.f32.mrf.mxu0
        %v1210 = vadd.f32 0.0, %v1209
        %1211 = vdwg.mxu0
        %v1213 = vsel %vm309, %v214, 0
        %v1216 = vsel %vm313, %v1096, 0
        %v1219 = vsel %vm313, %v1097, 0
        %1221 = vmatprep.subr.mxu0 0.0
        %1222 = vmatpush1.msra.mxu0 0.0
        %1223 = vmatprep.subr.mxu0 0.0
        %1224 = vmatpush1.msra.mxu0 0.0
        %1225 = vmatprep.subr.mxu0 0.0
        %1226 = vmatpush1.msra.mxu0 0.0
        %1227 = vmatprep.subr.mxu0 0.0
        %1228 = vmatpush1.msra.mxu0 0.0
        %1229 = vmatprep.subr.mxu0 0.0
        %1230 = vmatpush1.msra.mxu0 0.0
        %1231 = vmatprep.subr.mxu0 0.0
        %1232 = vmatpush1.msra.mxu0 0.0
        %1233 = vmatprep.subr.mxu0 0.0
        %1234 = vmatpush1.msra.mxu0 0.0
        %1235 = vmatprep.subr.mxu0 0.0
        %1236 = vmatpush1.msra.mxu0 0.0
        %1237 = vmatprep.subr.mxu0 0.0
        %1238 = vmatpush1.msra.mxu0 0.0
        %1239 = vmatprep.subr.mxu0 0.0
        %1240 = vmatpush1.msra.mxu0 0.0
        %1241 = vmatprep.subr.mxu0 0.0
        %1242 = vmatpush1.msra.mxu0 0.0
        %1243 = vmatprep.subr.mxu0 0.0
        %1244 = vmatpush1.msra.mxu0 0.0
        %1245 = vmatprep.subr.mxu0 0.0
        %1246 = vmatpush1.msra.mxu0 0.0
        %1247 = vmatprep.subr.mxu0 0.0
        %1248 = vmatpush1.msra.mxu0 0.0
        %1249 = vmatprep.subr.mxu0 0.0
        %1250 = vmatpush1.msra.mxu0 0.0
        %1251 = vmatprep.subr.mxu0 %v1219
        %1252 = vmatpush1.msra.mxu0 %v1216
        %1253 = vmatprep.subr.mxu0 0.0
        %1254 = vmatpush2.msra.mxu0 0.0
        %1255 = vmatprep.subr.mxu0 0.0
        %1256 = vmatpush2.msra.mxu0 0.0
        %1257 = vmatprep.subr.mxu0 0.0
        %1258 = vmatpush2.msra.mxu0 0.0
        %1259 = vmatprep.subr.mxu0 0.0
        %1260 = vmatpush2.msra.mxu0 0.0
        %1261 = vmatprep.subr.mxu0 0.0
        %1262 = vmatpush2.msra.mxu0 0.0
        %1263 = vmatprep.subr.mxu0 0.0
        %1264 = vmatpush2.msra.mxu0 0.0
        %1265 = vmatprep.subr.mxu0 0.0
        %1266 = vmatpush2.msra.mxu0 0.0
        %1267 = vmatprep.subr.mxu0 0.0
        %1268 = vmatpush2.msra.mxu0 0.0
        %1269 = vmatprep.subr.mxu0 0.0
        %1270 = vmatpush2.msra.mxu0 0.0
        %1271 = vmatprep.subr.mxu0 0.0
        %1272 = vmatpush2.msra.mxu0 0.0
        %1273 = vmatprep.subr.mxu0 0.0
        %1274 = vmatpush2.msra.mxu0 0.0
        %1275 = vmatprep.subr.mxu0 0.0
        %1276 = vmatpush2.msra.mxu0 0.0
        %1277 = vmatprep.subr.mxu0 0.0
        %1278 = vmatpush2.msra.mxu0 0.0
        %1279 = vmatprep.subr.mxu0 0.0
        %1280 = vmatpush2.msra.mxu0 0.0
        %1281 = vmatprep.subr.mxu0 0.0
        %1282 = vmatpush2.msra.mxu0 0.0
        %1283 = vmatprep.subr.mxu0 0.0
        %1284 = vmatpush2.msra.mxu0 0.0
        %1285 = vmatprep.mubr.f32.mxu0 0.0
        %1286 = vmatmul.mubr.f32.gmra.mxu0 %v1213
        %v1287 = vpop.f32.mrf.mxu0
        %v1288 = vadd.f32 %v1208, %v1287
        %v1289 = vpop.f32.mrf.mxu0
        %v1290 = vadd.f32 %v1210, %v1289
        %1291 = vdwg.mxu0
        %v1293 = vsel %vm309, %v216, 0
        %v1296 = vsel %vm313, %v1098, 0
        %v1299 = vsel %vm313, %v1099, 0
        %1301 = vmatprep.subr.mxu0 0.0
        %1302 = vmatpush1.msra.mxu0 0.0
        %1303 = vmatprep.subr.mxu0 0.0
        %1304 = vmatpush1.msra.mxu0 0.0
        %1305 = vmatprep.subr.mxu0 0.0
        %1306 = vmatpush1.msra.mxu0 0.0
        %1307 = vmatprep.subr.mxu0 0.0
        %1308 = vmatpush1.msra.mxu0 0.0
        %1309 = vmatprep.subr.mxu0 0.0
        %1310 = vmatpush1.msra.mxu0 0.0
        %1311 = vmatprep.subr.mxu0 0.0
        %1312 = vmatpush1.msra.mxu0 0.0
        %1313 = vmatprep.subr.mxu0 0.0
        %1314 = vmatpush1.msra.mxu0 0.0
        %1315 = vmatprep.subr.mxu0 0.0
        %1316 = vmatpush1.msra.mxu0 0.0
        %1317 = vmatprep.subr.mxu0 0.0
        %1318 = vmatpush1.msra.mxu0 0.0
        %1319 = vmatprep.subr.mxu0 0.0
        %1320 = vmatpush1.msra.mxu0 0.0
        %1321 = vmatprep.subr.mxu0 0.0
        %1322 = vmatpush1.msra.mxu0 0.0
        %1323 = vmatprep.subr.mxu0 0.0
        %1324 = vmatpush1.msra.mxu0 0.0
        %1325 = vmatprep.subr.mxu0 0.0
        %1326 = vmatpush1.msra.mxu0 0.0
        %1327 = vmatprep.subr.mxu0 0.0
        %1328 = vmatpush1.msra.mxu0 0.0
        %1329 = vmatprep.subr.mxu0 0.0
        %1330 = vmatpush1.msra.mxu0 0.0
        %1331 = vmatprep.subr.mxu0 %v1299
        %1332 = vmatpush1.msra.mxu0 %v1296
        %1333 = vmatprep.subr.mxu0 0.0
        %1334 = vmatpush2.msra.mxu0 0.0
        %1335 = vmatprep.subr.mxu0 0.0
        %1336 = vmatpush2.msra.mxu0 0.0
        %1337 = vmatprep.subr.mxu0 0.0
        %1338 = vmatpush2.msra.mxu0 0.0
        %1339 = vmatprep.subr.mxu0 0.0
        %1340 = vmatpush2.msra.mxu0 0.0
        %1341 = vmatprep.subr.mxu0 0.0
        %1342 = vmatpush2.msra.mxu0 0.0
        %1343 = vmatprep.subr.mxu0 0.0
        %1344 = vmatpush2.msra.mxu0 0.0
        %1345 = vmatprep.subr.mxu0 0.0
        %1346 = vmatpush2.msra.mxu0 0.0
        %1347 = vmatprep.subr.mxu0 0.0
        %1348 = vmatpush2.msra.mxu0 0.0
        %1349 = vmatprep.subr.mxu0 0.0
        %1350 = vmatpush2.msra.mxu0 0.0
        %1351 = vmatprep.subr.mxu0 0.0
        %1352 = vmatpush2.msra.mxu0 0.0
        %1353 = vmatprep.subr.mxu0 0.0
        %1354 = vmatpush2.msra.mxu0 0.0
        %1355 = vmatprep.subr.mxu0 0.0
        %1356 = vmatpush2.msra.mxu0 0.0
        %1357 = vmatprep.subr.mxu0 0.0
        %1358 = vmatpush2.msra.mxu0 0.0
        %1359 = vmatprep.subr.mxu0 0.0
        %1360 = vmatpush2.msra.mxu0 0.0
        %1361 = vmatprep.subr.mxu0 0.0
        %1362 = vmatpush2.msra.mxu0 0.0
        %1363 = vmatprep.subr.mxu0 0.0
        %1364 = vmatpush2.msra.mxu0 0.0
        %1365 = vmatprep.mubr.f32.mxu0 0.0
        %1366 = vmatmul.mubr.f32.gmra.mxu0 %v1293
        %v1367 = vpop.f32.mrf.mxu0
        %v1368 = vadd.f32 0.0, %v1367
        %v1369 = vpop.f32.mrf.mxu0
        %v1370 = vadd.f32 0.0, %v1369
        %1371 = vdwg.mxu0
        %v1372 = vadd.f32 %v1288, %v1368
        %v1373 = vadd.f32 %v1290, %v1370
        %v1375 = vsel %vm309, %v217, 0
        %v1378 = vsel %vm313, %v1112, 0
        %v1381 = vsel %vm313, %v1113, 0
        %1383 = vmatprep.subr.mxu0 0.0
        %1384 = vmatpush1.msra.mxu0 0.0
        %1385 = vmatprep.subr.mxu0 0.0
        %1386 = vmatpush1.msra.mxu0 0.0
        %1387 = vmatprep.subr.mxu0 0.0
        %1388 = vmatpush1.msra.mxu0 0.0
        %1389 = vmatprep.subr.mxu0 0.0
        %1390 = vmatpush1.msra.mxu0 0.0
        %1391 = vmatprep.subr.mxu0 0.0
        %1392 = vmatpush1.msra.mxu0 0.0
        %1393 = vmatprep.subr.mxu0 0.0
        %1394 = vmatpush1.msra.mxu0 0.0
        %1395 = vmatprep.subr.mxu0 0.0
        %1396 = vmatpush1.msra.mxu0 0.0
        %1397 = vmatprep.subr.mxu0 0.0
        %1398 = vmatpush1.msra.mxu0 0.0
        %1399 = vmatprep.subr.mxu0 0.0
        %1400 = vmatpush1.msra.mxu0 0.0
        %1401 = vmatprep.subr.mxu0 0.0
        %1402 = vmatpush1.msra.mxu0 0.0
        %1403 = vmatprep.subr.mxu0 0.0
        %1404 = vmatpush1.msra.mxu0 0.0
        %1405 = vmatprep.subr.mxu0 0.0
        %1406 = vmatpush1.msra.mxu0 0.0
        %1407 = vmatprep.subr.mxu0 0.0
        %1408 = vmatpush1.msra.mxu0 0.0
        %1409 = vmatprep.subr.mxu0 0.0
        %1410 = vmatpush1.msra.mxu0 0.0
        %1411 = vmatprep.subr.mxu0 0.0
        %1412 = vmatpush1.msra.mxu0 0.0
        %1413 = vmatprep.subr.mxu0 %v1381
        %1414 = vmatpush1.msra.mxu0 %v1378
        %1415 = vmatprep.subr.mxu0 0.0
        %1416 = vmatpush2.msra.mxu0 0.0
        %1417 = vmatprep.subr.mxu0 0.0
        %1418 = vmatpush2.msra.mxu0 0.0
        %1419 = vmatprep.subr.mxu0 0.0
        %1420 = vmatpush2.msra.mxu0 0.0
        %1421 = vmatprep.subr.mxu0 0.0
        %1422 = vmatpush2.msra.mxu0 0.0
        %1423 = vmatprep.subr.mxu0 0.0
        %1424 = vmatpush2.msra.mxu0 0.0
        %1425 = vmatprep.subr.mxu0 0.0
        %1426 = vmatpush2.msra.mxu0 0.0
        %1427 = vmatprep.subr.mxu0 0.0
        %1428 = vmatpush2.msra.mxu0 0.0
        %1429 = vmatprep.subr.mxu0 0.0
        %1430 = vmatpush2.msra.mxu0 0.0
        %1431 = vmatprep.subr.mxu0 0.0
        %1432 = vmatpush2.msra.mxu0 0.0
        %1433 = vmatprep.subr.mxu0 0.0
        %1434 = vmatpush2.msra.mxu0 0.0
        %1435 = vmatprep.subr.mxu0 0.0
        %1436 = vmatpush2.msra.mxu0 0.0
        %1437 = vmatprep.subr.mxu0 0.0
        %1438 = vmatpush2.msra.mxu0 0.0
        %1439 = vmatprep.subr.mxu0 0.0
        %1440 = vmatpush2.msra.mxu0 0.0
        %1441 = vmatprep.subr.mxu0 0.0
        %1442 = vmatpush2.msra.mxu0 0.0
        %1443 = vmatprep.subr.mxu0 0.0
        %1444 = vmatpush2.msra.mxu0 0.0
        %1445 = vmatprep.subr.mxu0 0.0
        %1446 = vmatpush2.msra.mxu0 0.0
        %1447 = vmatprep.mubr.f32.mxu0 0.0
        %1448 = vmatmul.mubr.f32.gmra.mxu0 %v1375
        %v1449 = vpop.f32.mrf.mxu0
        %v1450 = vadd.f32 0.0, %v1449
        %v1451 = vpop.f32.mrf.mxu0
        %v1452 = vadd.f32 0.0, %v1451
        %1453 = vdwg.mxu0
        %v1454 = vadd.f32 %v1372, %v1450
        %v1455 = vadd.f32 %v1373, %v1452
        %v1457 = vsel %vm309, %v218, 0
        %v1460 = vsel %vm313, %v1066, 0
        %v1463 = vsel %vm313, %v1067, 0
        %1465 = vmatprep.subr.mxu0 0.0
        %1466 = vmatpush1.msra.mxu0 0.0
        %1467 = vmatprep.subr.mxu0 0.0
        %1468 = vmatpush1.msra.mxu0 0.0
        %1469 = vmatprep.subr.mxu0 0.0
        %1470 = vmatpush1.msra.mxu0 0.0
        %1471 = vmatprep.subr.mxu0 0.0
        %1472 = vmatpush1.msra.mxu0 0.0
        %1473 = vmatprep.subr.mxu0 0.0
        %1474 = vmatpush1.msra.mxu0 0.0
        %1475 = vmatprep.subr.mxu0 0.0
        %1476 = vmatpush1.msra.mxu0 0.0
        %1477 = vmatprep.subr.mxu0 0.0
        %1478 = vmatpush1.msra.mxu0 0.0
        %1479 = vmatprep.subr.mxu0 0.0
        %1480 = vmatpush1.msra.mxu0 0.0
        %1481 = vmatprep.subr.mxu0 0.0
        %1482 = vmatpush1.msra.mxu0 0.0
        %1483 = vmatprep.subr.mxu0 0.0
        %1484 = vmatpush1.msra.mxu0 0.0
        %1485 = vmatprep.subr.mxu0 0.0
        %1486 = vmatpush1.msra.mxu0 0.0
        %1487 = vmatprep.subr.mxu0 0.0
        %1488 = vmatpush1.msra.mxu0 0.0
        %1489 = vmatprep.subr.mxu0 0.0
        %1490 = vmatpush1.msra.mxu0 0.0
        %1491 = vmatprep.subr.mxu0 0.0
        %1492 = vmatpush1.msra.mxu0 0.0
        %1493 = vmatprep.subr.mxu0 0.0
        %1494 = vmatpush1.msra.mxu0 0.0
        %1495 = vmatprep.subr.mxu0 %v1463
        %1496 = vmatpush1.msra.mxu0 %v1460
        %1497 = vmatprep.subr.mxu0 0.0
        %1498 = vmatpush2.msra.mxu0 0.0
        %1499 = vmatprep.subr.mxu0 0.0
        %1500 = vmatpush2.msra.mxu0 0.0
        %1501 = vmatprep.subr.mxu0 0.0
        %1502 = vmatpush2.msra.mxu0 0.0
        %1503 = vmatprep.subr.mxu0 0.0
        %1504 = vmatpush2.msra.mxu0 0.0
        %1505 = vmatprep.subr.mxu0 0.0
        %1506 = vmatpush2.msra.mxu0 0.0
        %1507 = vmatprep.subr.mxu0 0.0
        %1508 = vmatpush2.msra.mxu0 0.0
        %1509 = vmatprep.subr.mxu0 0.0
        %1510 = vmatpush2.msra.mxu0 0.0
        %1511 = vmatprep.subr.mxu0 0.0
        %1512 = vmatpush2.msra.mxu0 0.0
        %1513 = vmatprep.subr.mxu0 0.0
        %1514 = vmatpush2.msra.mxu0 0.0
        %1515 = vmatprep.subr.mxu0 0.0
        %1516 = vmatpush2.msra.mxu0 0.0
        %1517 = vmatprep.subr.mxu0 0.0
        %1518 = vmatpush2.msra.mxu0 0.0
        %1519 = vmatprep.subr.mxu0 0.0
        %1520 = vmatpush2.msra.mxu0 0.0
        %1521 = vmatprep.subr.mxu0 0.0
        %1522 = vmatpush2.msra.mxu0 0.0
        %1523 = vmatprep.subr.mxu0 0.0
        %1524 = vmatpush2.msra.mxu0 0.0
        %1525 = vmatprep.subr.mxu0 0.0
        %1526 = vmatpush2.msra.mxu0 0.0
        %1527 = vmatprep.subr.mxu0 0.0
        %1528 = vmatpush2.msra.mxu0 0.0
        %1529 = vmatprep.mubr.f32.mxu0 0.0
        %1530 = vmatmul.mubr.f32.gmra.mxu0 %v1457
        %v1531 = vpop.f32.mrf.mxu0
        %v1532 = vadd.f32 0.0, %v1531
        %v1533 = vpop.f32.mrf.mxu0
        %v1534 = vadd.f32 0.0, %v1533
        %1535 = vdwg.mxu0
        %v1536 = vadd.f32 %v1454, %v1532
        %v1537 = vadd.f32 %v1455, %v1534
        %v1539 = vsel %vm309, %v219, 0
        %v1542 = vsel %vm313, %v1114, 0
        %v1545 = vsel %vm313, %v1115, 0
        %1547 = vmatprep.subr.mxu0 0.0
        %1548 = vmatpush1.msra.mxu0 0.0
        %1549 = vmatprep.subr.mxu0 0.0
        %1550 = vmatpush1.msra.mxu0 0.0
        %1551 = vmatprep.subr.mxu0 0.0
        %1552 = vmatpush1.msra.mxu0 0.0
        %1553 = vmatprep.subr.mxu0 0.0
        %1554 = vmatpush1.msra.mxu0 0.0
        %1555 = vmatprep.subr.mxu0 0.0
        %1556 = vmatpush1.msra.mxu0 0.0
        %1557 = vmatprep.subr.mxu0 0.0
        %1558 = vmatpush1.msra.mxu0 0.0
        %1559 = vmatprep.subr.mxu0 0.0
        %1560 = vmatpush1.msra.mxu0 0.0
        %1561 = vmatprep.subr.mxu0 0.0
        %1562 = vmatpush1.msra.mxu0 0.0
        %1563 = vmatprep.subr.mxu0 0.0
        %1564 = vmatpush1.msra.mxu0 0.0
        %1565 = vmatprep.subr.mxu0 0.0
        %1566 = vmatpush1.msra.mxu0 0.0
        %1567 = vmatprep.subr.mxu0 0.0
        %1568 = vmatpush1.msra.mxu0 0.0
        %1569 = vmatprep.subr.mxu0 0.0
        %1570 = vmatpush1.msra.mxu0 0.0
        %1571 = vmatprep.subr.mxu0 0.0
        %1572 = vmatpush1.msra.mxu0 0.0
        %1573 = vmatprep.subr.mxu0 0.0
        %1574 = vmatpush1.msra.mxu0 0.0
        %1575 = vmatprep.subr.mxu0 0.0
        %1576 = vmatpush1.msra.mxu0 0.0
        %1577 = vmatprep.subr.mxu0 %v1545
        %1578 = vmatpush1.msra.mxu0 %v1542
        %1579 = vmatprep.subr.mxu0 0.0
        %1580 = vmatpush2.msra.mxu0 0.0
        %1581 = vmatprep.subr.mxu0 0.0
        %1582 = vmatpush2.msra.mxu0 0.0
        %1583 = vmatprep.subr.mxu0 0.0
        %1584 = vmatpush2.msra.mxu0 0.0
        %1585 = vmatprep.subr.mxu0 0.0
        %1586 = vmatpush2.msra.mxu0 0.0
        %1587 = vmatprep.subr.mxu0 0.0
        %1588 = vmatpush2.msra.mxu0 0.0
        %1589 = vmatprep.subr.mxu0 0.0
        %1590 = vmatpush2.msra.mxu0 0.0
        %1591 = vmatprep.subr.mxu0 0.0
        %1592 = vmatpush2.msra.mxu0 0.0
        %1593 = vmatprep.subr.mxu0 0.0
        %1594 = vmatpush2.msra.mxu0 0.0
        %1595 = vmatprep.subr.mxu0 0.0
        %1596 = vmatpush2.msra.mxu0 0.0
        %1597 = vmatprep.subr.mxu0 0.0
        %1598 = vmatpush2.msra.mxu0 0.0
        %1599 = vmatprep.subr.mxu0 0.0
        %1600 = vmatpush2.msra.mxu0 0.0
        %1601 = vmatprep.subr.mxu0 0.0
        %1602 = vmatpush2.msra.mxu0 0.0
        %1603 = vmatprep.subr.mxu0 0.0
        %1604 = vmatpush2.msra.mxu0 0.0
        %1605 = vmatprep.subr.mxu0 0.0
        %1606 = vmatpush2.msra.mxu0 0.0
        %1607 = vmatprep.subr.mxu0 0.0
        %1608 = vmatpush2.msra.mxu0 0.0
        %1609 = vmatprep.subr.mxu0 0.0
        %1610 = vmatpush2.msra.mxu0 0.0
        %1611 = vmatprep.mubr.f32.mxu0 0.0
        %1612 = vmatmul.mubr.f32.gmra.mxu0 %v1539
        %v1613 = vpop.f32.mrf.mxu0
        %v1614 = vadd.f32 0.0, %v1613
        %v1615 = vpop.f32.mrf.mxu0
        %v1616 = vadd.f32 0.0, %v1615
        %1617 = vdwg.mxu0
        %v1618 = vadd.f32 %v1536, %v1614
        %v1619 = vadd.f32 %v1537, %v1616
        %v1621 = vsel %vm309, %v220, 0
        %v1624 = vsel %vm313, %v1128, 0
        %v1627 = vsel %vm313, %v1129, 0
        %1629 = vmatprep.subr.mxu0 0.0
        %1630 = vmatpush1.msra.mxu0 0.0
        %1631 = vmatprep.subr.mxu0 0.0
        %1632 = vmatpush1.msra.mxu0 0.0
        %1633 = vmatprep.subr.mxu0 0.0
        %1634 = vmatpush1.msra.mxu0 0.0
        %1635 = vmatprep.subr.mxu0 0.0
        %1636 = vmatpush1.msra.mxu0 0.0
        %1637 = vmatprep.subr.mxu0 0.0
        %1638 = vmatpush1.msra.mxu0 0.0
        %1639 = vmatprep.subr.mxu0 0.0
        %1640 = vmatpush1.msra.mxu0 0.0
        %1641 = vmatprep.subr.mxu0 0.0
        %1642 = vmatpush1.msra.mxu0 0.0
        %1643 = vmatprep.subr.mxu0 0.0
        %1644 = vmatpush1.msra.mxu0 0.0
        %1645 = vmatprep.subr.mxu0 0.0
        %1646 = vmatpush1.msra.mxu0 0.0
        %1647 = vmatprep.subr.mxu0 0.0
        %1648 = vmatpush1.msra.mxu0 0.0
        %1649 = vmatprep.subr.mxu0 0.0
        %1650 = vmatpush1.msra.mxu0 0.0
        %1651 = vmatprep.subr.mxu0 0.0
        %1652 = vmatpush1.msra.mxu0 0.0
        %1653 = vmatprep.subr.mxu0 0.0
        %1654 = vmatpush1.msra.mxu0 0.0
        %1655 = vmatprep.subr.mxu0 0.0
        %1656 = vmatpush1.msra.mxu0 0.0
        %1657 = vmatprep.subr.mxu0 0.0
        %1658 = vmatpush1.msra.mxu0 0.0
        %1659 = vmatprep.subr.mxu0 %v1627
        %1660 = vmatpush1.msra.mxu0 %v1624
        %1661 = vmatprep.subr.mxu0 0.0
        %1662 = vmatpush2.msra.mxu0 0.0
        %1663 = vmatprep.subr.mxu0 0.0
        %1664 = vmatpush2.msra.mxu0 0.0
        %1665 = vmatprep.subr.mxu0 0.0
        %1666 = vmatpush2.msra.mxu0 0.0
        %1667 = vmatprep.subr.mxu0 0.0
        %1668 = vmatpush2.msra.mxu0 0.0
        %1669 = vmatprep.subr.mxu0 0.0
        %1670 = vmatpush2.msra.mxu0 0.0
        %1671 = vmatprep.subr.mxu0 0.0
        %1672 = vmatpush2.msra.mxu0 0.0
        %1673 = vmatprep.subr.mxu0 0.0
        %1674 = vmatpush2.msra.mxu0 0.0
        %1675 = vmatprep.subr.mxu0 0.0
        %1676 = vmatpush2.msra.mxu0 0.0
        %1677 = vmatprep.subr.mxu0 0.0
        %1678 = vmatpush2.msra.mxu0 0.0
        %1679 = vmatprep.subr.mxu0 0.0
        %1680 = vmatpush2.msra.mxu0 0.0
        %1681 = vmatprep.subr.mxu0 0.0
        %1682 = vmatpush2.msra.mxu0 0.0
        %1683 = vmatprep.subr.mxu0 0.0
        %1684 = vmatpush2.msra.mxu0 0.0
        %1685 = vmatprep.subr.mxu0 0.0
        %1686 = vmatpush2.msra.mxu0 0.0
        %1687 = vmatprep.subr.mxu0 0.0
        %1688 = vmatpush2.msra.mxu0 0.0
        %1689 = vmatprep.subr.mxu0 0.0
        %1690 = vmatpush2.msra.mxu0 0.0
        %1691 = vmatprep.subr.mxu0 0.0
        %1692 = vmatpush2.msra.mxu0 0.0
        %1693 = vmatprep.mubr.f32.mxu0 0.0
        %1694 = vmatmul.mubr.f32.gmra.mxu0 %v1621
        %v1695 = vpop.f32.mrf.mxu0
        %v1696 = vadd.f32 0.0, %v1695
        %v1697 = vpop.f32.mrf.mxu0
        %v1698 = vadd.f32 0.0, %v1697
        %1699 = vdwg.mxu0
        %v1700 = vadd.f32 %v1618, %v1696
        %v1701 = vadd.f32 %v1619, %v1698
        %v1703 = vsel %vm309, %v221, 0
        %v1706 = vsel %vm313, %v1082, 0
        %v1709 = vsel %vm313, %v1083, 0
        %1711 = vmatprep.subr.mxu0 0.0
        %1712 = vmatpush1.msra.mxu0 0.0
        %1713 = vmatprep.subr.mxu0 0.0
        %1714 = vmatpush1.msra.mxu0 0.0
        %1715 = vmatprep.subr.mxu0 0.0
        %1716 = vmatpush1.msra.mxu0 0.0
        %1717 = vmatprep.subr.mxu0 0.0
        %1718 = vmatpush1.msra.mxu0 0.0
        %1719 = vmatprep.subr.mxu0 0.0
        %1720 = vmatpush1.msra.mxu0 0.0
        %1721 = vmatprep.subr.mxu0 0.0
        %1722 = vmatpush1.msra.mxu0 0.0
        %1723 = vmatprep.subr.mxu0 0.0
        %1724 = vmatpush1.msra.mxu0 0.0
        %1725 = vmatprep.subr.mxu0 0.0
        %1726 = vmatpush1.msra.mxu0 0.0
        %1727 = vmatprep.subr.mxu0 0.0
        %1728 = vmatpush1.msra.mxu0 0.0
        %1729 = vmatprep.subr.mxu0 0.0
        %1730 = vmatpush1.msra.mxu0 0.0
        %1731 = vmatprep.subr.mxu0 0.0
        %1732 = vmatpush1.msra.mxu0 0.0
        %1733 = vmatprep.subr.mxu0 0.0
        %1734 = vmatpush1.msra.mxu0 0.0
        %1735 = vmatprep.subr.mxu0 0.0
        %1736 = vmatpush1.msra.mxu0 0.0
        %1737 = vmatprep.subr.mxu0 0.0
        %1738 = vmatpush1.msra.mxu0 0.0
        %1739 = vmatprep.subr.mxu0 0.0
        %1740 = vmatpush1.msra.mxu0 0.0
        %1741 = vmatprep.subr.mxu0 %v1709
        %1742 = vmatpush1.msra.mxu0 %v1706
        %1743 = vmatprep.subr.mxu0 0.0
        %1744 = vmatpush2.msra.mxu0 0.0
        %1745 = vmatprep.subr.mxu0 0.0
        %1746 = vmatpush2.msra.mxu0 0.0
        %1747 = vmatprep.subr.mxu0 0.0
        %1748 = vmatpush2.msra.mxu0 0.0
        %1749 = vmatprep.subr.mxu0 0.0
        %1750 = vmatpush2.msra.mxu0 0.0
        %1751 = vmatprep.subr.mxu0 0.0
        %1752 = vmatpush2.msra.mxu0 0.0
        %1753 = vmatprep.subr.mxu0 0.0
        %1754 = vmatpush2.msra.mxu0 0.0
        %1755 = vmatprep.subr.mxu0 0.0
        %1756 = vmatpush2.msra.mxu0 0.0
        %1757 = vmatprep.subr.mxu0 0.0
        %1758 = vmatpush2.msra.mxu0 0.0
        %1759 = vmatprep.subr.mxu0 0.0
        %1760 = vmatpush2.msra.mxu0 0.0
        %1761 = vmatprep.subr.mxu0 0.0
        %1762 = vmatpush2.msra.mxu0 0.0
        %1763 = vmatprep.subr.mxu0 0.0
        %1764 = vmatpush2.msra.mxu0 0.0
        %1765 = vmatprep.subr.mxu0 0.0
        %1766 = vmatpush2.msra.mxu0 0.0
        %1767 = vmatprep.subr.mxu0 0.0
        %1768 = vmatpush2.msra.mxu0 0.0
        %1769 = vmatprep.subr.mxu0 0.0
        %1770 = vmatpush2.msra.mxu0 0.0
        %1771 = vmatprep.subr.mxu0 0.0
        %1772 = vmatpush2.msra.mxu0 0.0
        %1773 = vmatprep.subr.mxu0 0.0
        %1774 = vmatpush2.msra.mxu0 0.0
        %1775 = vmatprep.mubr.f32.mxu0 0.0
        %1776 = vmatmul.mubr.f32.gmra.mxu0 %v1703
        %v1777 = vpop.f32.mrf.mxu0
        %v1778 = vadd.f32 0.0, %v1777
        %v1779 = vpop.f32.mrf.mxu0
        %v1780 = vadd.f32 0.0, %v1779
        %1781 = vdwg.mxu0
        %v1782 = vadd.f32 %v1700, %v1778
        %v1783 = vadd.f32 %v1701, %v1780
        %v1785 = vsel %vm309, %v222, 0
        %v1788 = vsel %vm313, %v1130, 0
        %v1791 = vsel %vm313, %v1131, 0
        %1793 = vmatprep.subr.mxu0 0.0
        %1794 = vmatpush1.msra.mxu0 0.0
        %1795 = vmatprep.subr.mxu0 0.0
        %1796 = vmatpush1.msra.mxu0 0.0
        %1797 = vmatprep.subr.mxu0 0.0
        %1798 = vmatpush1.msra.mxu0 0.0
        %1799 = vmatprep.subr.mxu0 0.0
        %1800 = vmatpush1.msra.mxu0 0.0
        %1801 = vmatprep.subr.mxu0 0.0
        %1802 = vmatpush1.msra.mxu0 0.0
        %1803 = vmatprep.subr.mxu0 0.0
        %1804 = vmatpush1.msra.mxu0 0.0
        %1805 = vmatprep.subr.mxu0 0.0
        %1806 = vmatpush1.msra.mxu0 0.0
        %1807 = vmatprep.subr.mxu0 0.0
        %1808 = vmatpush1.msra.mxu0 0.0
        %1809 = vmatprep.subr.mxu0 0.0
        %1810 = vmatpush1.msra.mxu0 0.0
        %1811 = vmatprep.subr.mxu0 0.0
        %1812 = vmatpush1.msra.mxu0 0.0
        %1813 = vmatprep.subr.mxu0 0.0
        %1814 = vmatpush1.msra.mxu0 0.0
        %1815 = vmatprep.subr.mxu0 0.0
        %1816 = vmatpush1.msra.mxu0 0.0
        %1817 = vmatprep.subr.mxu0 0.0
        %1818 = vmatpush1.msra.mxu0 0.0
        %1819 = vmatprep.subr.mxu0 0.0
        %1820 = vmatpush1.msra.mxu0 0.0
        %1821 = vmatprep.subr.mxu0 0.0
        %1822 = vmatpush1.msra.mxu0 0.0
        %1823 = vmatprep.subr.mxu0 %v1791
        %1824 = vmatpush1.msra.mxu0 %v1788
        %1825 = vmatprep.subr.mxu0 0.0
        %1826 = vmatpush2.msra.mxu0 0.0
        %1827 = vmatprep.subr.mxu0 0.0
        %1828 = vmatpush2.msra.mxu0 0.0
        %1829 = vmatprep.subr.mxu0 0.0
        %1830 = vmatpush2.msra.mxu0 0.0
        %1831 = vmatprep.subr.mxu0 0.0
        %1832 = vmatpush2.msra.mxu0 0.0
        %1833 = vmatprep.subr.mxu0 0.0
        %1834 = vmatpush2.msra.mxu0 0.0
        %1835 = vmatprep.subr.mxu0 0.0
        %1836 = vmatpush2.msra.mxu0 0.0
        %1837 = vmatprep.subr.mxu0 0.0
        %1838 = vmatpush2.msra.mxu0 0.0
        %1839 = vmatprep.subr.mxu0 0.0
        %1840 = vmatpush2.msra.mxu0 0.0
        %1841 = vmatprep.subr.mxu0 0.0
        %1842 = vmatpush2.msra.mxu0 0.0
        %1843 = vmatprep.subr.mxu0 0.0
        %1844 = vmatpush2.msra.mxu0 0.0
        %1845 = vmatprep.subr.mxu0 0.0
        %1846 = vmatpush2.msra.mxu0 0.0
        %1847 = vmatprep.subr.mxu0 0.0
        %1848 = vmatpush2.msra.mxu0 0.0
        %1849 = vmatprep.subr.mxu0 0.0
        %1850 = vmatpush2.msra.mxu0 0.0
        %1851 = vmatprep.subr.mxu0 0.0
        %1852 = vmatpush2.msra.mxu0 0.0
        %1853 = vmatprep.subr.mxu0 0.0
        %1854 = vmatpush2.msra.mxu0 0.0
        %1855 = vmatprep.subr.mxu0 0.0
        %1856 = vmatpush2.msra.mxu0 0.0
        %1857 = vmatprep.mubr.f32.mxu0 0.0
        %1858 = vmatmul.mubr.f32.gmra.mxu0 %v1785
        %v1859 = vpop.f32.mrf.mxu0
        %v1860 = vadd.f32 0.0, %v1859
        %v1861 = vpop.f32.mrf.mxu0
        %v1862 = vadd.f32 0.0, %v1861
        %1863 = vdwg.mxu0
        %v1864 = vadd.f32 %v1782, %v1860
        %v1865 = vadd.f32 %v1783, %v1862
        %v1866 = vsel %vm313, %v1864, 0.0
        %v1867 = vsel %vm313, %v1865, 0.0
        %v1868 = vadd.f32 %v1866, %v1867
        %1869 = vadd.xlane.f32.xlu0 %v1868
        %v1870 = vpop.xlane.xlu0 %1869
        %v1871 = vmul.f32 %v1870, 0.00390625
        %v1872 = vmul.f32 %v1864, %v1864
        %v1873 = vmul.f32 %v1865, %v1865
        %v1874 = vsel %vm313, %v1872, 0.0
        %v1875 = vsel %vm313, %v1873, 0.0
        %v1876 = vadd.f32 %v1874, %v1875
        %1877 = vadd.xlane.f32.xlu0 %v1876
        %v1878 = vpop.xlane.xlu0 %1877
        %v1879 = vmul.f32 %v1878, 0.00390625
        %v1880 = vmul.f32 %v1871, %v1871
        %v1881 = vsub.f32 %v1879, %v1880
        %v1882 = vmax.f32 %v1881, 0.0
        %v1883 = vsub.f32 %v1864, %v1871
        %v1884 = vsub.f32 %v1865, %v1871
        %v1885 = vadd.f32 %v1882, 1e-05
        %v1886 = vrsqrt.pop %v1885
        %v1887 = vmul.f32 %v1883, %v1886
        %v1888 = vmul.f32 %v1884, %v1886
        %v1891 = vcombine.low %v1887, %v1888
        %v1893 = vadd.f32 %v169, %v1891
        %1894 = vst [vmem:[%s163] sm:$0xff] %v1893
        %s1895 = sand.u32 %s93, 1
        %s1896 = scalar_lea.sflag [#allocation3], %s1895
        %s1897 = sand.u32 %s93, 1
        %s1898 = smul.addr %s1897, 8
        %s1899 = scalar_lea.vmem [#allocation2], %s1898
        // Predicated region
        $region33: #{tpu_custom_call.1} parent=31 // pred_check
          %p1900 = pneg %p103
        $region34: #{tpu_custom_call.1} parent=31 // pred_check_branch
          %1902 = sbr.rel (%p1900) target = $region36
        $region35: #{tpu_custom_call.1} parent=31 // pred_region
          %s1904 = ssub.s32 128, 128
          %1905 = vsyncadd %s1896, %s1904
          %s1906 = smul.addr %s17, 2
          %s1907 = smul.addr %s1906, 64
          %s1908 = scalar_lea.hbm %s3, %s1907
          %s1910 = sshll.u32 %s1899, 4
          %s1911 = int_to_ptr.vmem [resolvable:$true] %s1910
          %1913 = dma.vmem_to_hbm [thread:$0]  %s1911, 128, %s1908, %s1896
        $region36: #{tpu_custom_call.1} parent=31 // pred_fallthru
          _
      $region32: #{tpu_custom_call.1} parent=5 // pred_fallthru
        _
      %p1914 = scmp.le.s32.totalorder 2, %s12
      // Predicated region
      $region37: #{tpu_custom_call.1} parent=5 // pred_check
        %p1915 = pneg %p1914
      $region38: #{tpu_custom_call.1} parent=5 // pred_check_branch
        %1917 = sbr.rel (%p1915) target = $region40
      $region39: #{tpu_custom_call.1} parent=5 // pred_region
        %s1918 = ssub.s32 %s12, 2
        // Predicated region
        $region41: #{tpu_custom_call.1} parent=39 // pred_check
          %p1919 = pneg %p109
        $region42: #{tpu_custom_call.1} parent=39 // pred_check_branch
          %1921 = sbr.rel (%p1919) target = $region44
        $region43: #{tpu_custom_call.1} parent=39 // pred_region
          %s1922 = sand.u32 %s94, 1
          %s1923 = scalar_lea.sflag [#allocation3], %s1922
          %s1924 = sand.u32 %s94, 1
          %s1925 = smul.addr %s1924, 8
          %s1926 = scalar_lea.vmem [#allocation2], %s1925
          %1927 = dma.done %s1923, 128
        $region44: #{tpu_custom_call.1} parent=39 // pred_fallthru
          _
      $region40: #{tpu_custom_call.1} parent=5 // pred_fallthru
        _
    $region6: #{tpu_custom_call.1} parent=1 // loop_footer
      %s16 = sadd.s32 1, %s12
    $region7: #{tpu_custom_call.1} parent=1 // loop_footer_branch
      %11 = sbr.rel target = $region3
    $region8: #{tpu_custom_call.1} parent=1 // loop_exit
      _
    %1928 = vsyncpa [#allocation3], 1
    %s1929 = scalar_lea.sflag [#allocation3], 1
    %1930 = vsyncpa %s1929, 1

</llo_original>
